<compile_context>
chip_gen: v7x
topology: tpu7x:2x2x1
jax: 0.10.0
libtpu: 0.0.40
codegen_flags: <defaults>
</compile_context>

<pallas_src>
import math

import numpy as np
import jax
import jax.numpy as jnp
from jax.experimental import pallas as pl
from jax.experimental.pallas import tpu as pltpu

# ----------------------------- configuration --------------------------------
D_NUM = 8                  # numeric features
CATEGORIES = [3, 5]        # categorical cardinalities
D_EMBEDDING = 4            # per-category embedding dim
NUM_LAYERS = 2             # DenseBlock layers
LAYER_DIM = 8              # trees per ODST layer
DEPTH = 3                  # tree depth (2**DEPTH leaves)
TREE_DIM = 2               # outputs per tree
D_OUT = 1                  # NODE d_out
BATCH = 256
MAX_TB = 1024              # max rows per grid step (one step at B<=1024)
OUT_PAD = 128              # lane-dense output slab width

D_IN = D_NUM + len(CATEGORIES) * D_EMBEDDING
N_LEAVES = 2 ** DEPTH
T_PAD = 16                 # trees padded so tree*leaf = 128 lanes per depth slice
GROUP = T_PAD * N_LEAVES   # 128 lanes per depth group (vreg-aligned slices)
L_LANES = DEPTH * GROUP    # selector output width


# ----------------------------- choice fn (param-only, plain JAX) -------------
def sparsemax(logits, axis):
    """Sparsemax projection (Martins & Astudillo, 2016) along `axis`."""
    z = jnp.flip(jnp.sort(logits, axis=axis), axis=axis)        # descending
    n = logits.shape[axis]
    shape = [1] * logits.ndim
    shape[axis] = n
    k = jnp.arange(1, n + 1, dtype=logits.dtype).reshape(shape)
    z_cumsum = jnp.cumsum(z, axis=axis)
    support = (1.0 + k * z) > z_cumsum
    k_z = jnp.sum(support.astype(logits.dtype), axis=axis, keepdims=True)
    idx = (k_z - 1).astype(jnp.int32)
    tau = (jnp.take_along_axis(z_cumsum, idx, axis=axis) - 1.0) / k_z
    return jnp.maximum(logits - tau, 0.0)


def _bin_codes():
    c = jnp.arange(N_LEAVES)
    d = 2 ** jnp.arange(DEPTH)
    return ((c[None, :] // d[:, None]) % 2).astype(jnp.float32)   # [depth, C]


# ----------------------------- fused Pallas NODE kernel ----------------------
def _make_node_kernel(*, num_layers, depth, group):
    """Fused DenseBlock(ODST x num_layers) + mean-over-trees head for one [TB, D] tile.

    Flat ref layout:
      x (bf16), mean_mat[T*K, OUT_PAD] (bf16),
      then per layer li: (li+1) selector pieces [src_dim, L_LANES] (bf16, sign/0.5/temp
      folded, split per dense-connection source), bias[1, L_LANES] (f32),
      respmat[GROUP, T*K] (bf16, block-diagonal, padded-tree rows zero),
      finally out_ref[TB, OUT_PAD] (f32).
    """
    def kernel(*refs):
        x_ref, mm_ref = refs[:2]
        out_ref = refs[-1]
        param_refs = refs[2:-1]

        sources = [x_ref[...]]                 # bf16 activations (dense connection)
        hsum = None                            # f32 running sum of layer responses

        idx = 0
        for li in range(num_layers):
            n_pieces = li + 1
            sel_refs = param_refs[idx: idx + n_pieces]; idx += n_pieces
            bias_ref = param_refs[idx]; idx += 1
            resp_ref = param_refs[idx]; idx += 1

            # feature selection (temperature / sign / 0.5 scale folded into selector)
            tl = None
            for src, sref in zip(sources, sel_refs):
                d = jnp.dot(src, sref[...], preferred_element_type=jnp.float32)
                tl = d if tl is None else tl + d

            # sparsemoid bin match: threshold & 0.5 offset folded into bias (f32 VPU)
            g = jnp.clip(tl + bias_ref[...], 0.0, 1.0)        # [TB, depth*group]

            # product over depth: vreg-aligned 128-wide lane slices (group == 128)
            rw = g[:, 0:group]
            for dd in range(1, depth):
                rw = rw * g[:, dd * group:(dd + 1) * group]

            # per-tree responses: K=group contraction, padded-tree rows are zero
            h = jnp.dot(rw.astype(jnp.bfloat16), resp_ref[...],
                        preferred_element_type=jnp.float32)   # [TB, T*K] f32
            if li + 1 < num_layers:
                sources.append(h.astype(jnp.bfloat16))
            hsum = h if hsum is None else hsum + h

        # fused head: mean over (layer, tree) of the first d_out response dims,
        # emitted as a lane-dense OUT_PAD-wide slab (unmasked full-vreg stores).
        out_ref[...] = jnp.dot(hsum.astype(jnp.bfloat16), mm_ref[...],
                               preferred_element_type=jnp.float32)

    return kernel


def node_block_forward(x, packed, *, max_tb=MAX_TB):
    """Run the fused NODE block with a Pallas kernel (single grid step at small batches)."""
    b, d_in = x.shape
    tb = min(max_tb, pl.cdiv(b, 128) * 128)        # grid=(1,) whenever b <= max_tb
    b_pad = pl.cdiv(b, tb) * tb
    if b_pad != b:                                 # don't silently drop trailing rows
        x = jnp.pad(x, ((0, b_pad - b), (0, 0)))
    xb = x.astype(jnp.bfloat16)                    # pre-cast: half the x DMA, no in-kernel cast

    inputs = [xb, packed["mean_mat"]]
    in_specs = [pl.BlockSpec((tb, d_in), lambda i: (i, 0)),
                pl.BlockSpec(packed["mean_mat"].shape, lambda i: (0, 0))]
    for lp in packed["layers"]:
        for piece in lp["sel_pieces"]:
            inputs.append(piece)
            in_specs.append(pl.BlockSpec(piece.shape, lambda i: (0, 0)))
        inputs.append(lp["bias"])
        in_specs.append(pl.BlockSpec(lp["bias"].shape, lambda i: (0, 0)))
        inputs.append(lp["respmat"])
        in_specs.append(pl.BlockSpec(lp["respmat"].shape, lambda i: (0, 0)))

    # advisory cost estimate (MXU flops + total bytes moved) for the XLA scheduler
    tk = LAYER_DIM * TREE_DIM
    flops = 0
    src_dims = [d_in]
    for _ in range(NUM_LAYERS):
        for sd in src_dims:
            flops += 2 * b_pad * sd * L_LANES
        flops += 2 * b_pad * GROUP * tk
        src_dims.append(tk)
    flops += 2 * b_pad * tk * OUT_PAD
    bytes_accessed = sum(int(np.prod(a.shape)) * a.dtype.itemsize for a in inputs)
    bytes_accessed += b_pad * OUT_PAD * 4

    kernel = _make_node_kernel(num_layers=NUM_LAYERS, depth=DEPTH, group=GROUP)
    out = pl.pallas_call(
        kernel,
        out_shape=jax.ShapeDtypeStruct((b_pad, OUT_PAD), jnp.float32),
        grid_spec=pltpu.PrefetchScalarGridSpec(
            num_scalar_prefetch=0,
            grid=(b_pad // tb,),
            in_specs=in_specs,
            out_specs=pl.BlockSpec((tb, OUT_PAD), lambda i: (i, 0)),
        ),
        compiler_params=pltpu.CompilerParams(
            dimension_semantics=("arbitrary",)),   # don't megacore-split a latency-bound loop
        cost_estimate=pl.CostEstimate(flops=flops, transcendentals=0,
                                      bytes_accessed=bytes_accessed),
    )(*inputs)
    return out[:b, :D_OUT]


# ----------------------------- parameter setup -------------------------------
def init_params(key):
    keys = jax.random.split(key, 2 + NUM_LAYERS)
    params = {}
    # nn.Embedding(sum(categories), d_embedding) with kaiming_uniform(a=sqrt(5))
    bound = 1.0 / math.sqrt(D_EMBEDDING)
    params["cat_emb"] = jax.random.uniform(
        keys[0], (sum(CATEGORIES), D_EMBEDDING), jnp.float32, -bound, bound)
    params["cat_offsets"] = jnp.asarray(
        np.cumsum([0] + CATEGORIES[:-1]), jnp.int32)

    layers = []
    d = D_IN
    for li in range(NUM_LAYERS):
        k = jax.random.split(keys[2 + li], 3)
        layers.append(dict(
            # initialize_selection_logits_ = nn.init.uniform_  -> U[0, 1)
            sel_logits=jax.random.uniform(k[0], (d, LAYER_DIM, DEPTH), jnp.float32),
            # initialize_response_ = nn.init.normal_
            response=jax.random.normal(k[1], (LAYER_DIM, TREE_DIM, N_LEAVES), jnp.float32),
            # data-aware init in the reference lib; deterministic synthetic init here
            thresholds=jax.random.normal(k[2], (LAYER_DIM, DEPTH), jnp.float32),
            log_temps=jnp.zeros((LAYER_DIM, DEPTH), jnp.float32),
        ))
        d += LAYER_DIM * TREE_DIM
    params["layers"] = layers
    return params


def pack_params(params):
    """Parameter-only preprocessing: sparsemax, temperature fold, sparsemoid sign/0.5/
    threshold fold, leaf tiling, and padding of trees 8->16 so each depth slice is a
    128-lane group.  Hoisted out of the forward; run once when params change."""
    T, K, C, depth = LAYER_DIM, TREE_DIM, N_LEAVES, DEPTH
    codes = _bin_codes()                                # [depth, C] in {0,1}
    sign = 0.5 * (1.0 - 2.0 * codes)                    # [depth, C], values +-0.5

    # fold matrix for mean over (layer, tree) of the first D_OUT tree outputs,
    # padded to a lane-dense OUT_PAD-wide slab.
    mean_np = np.zeros((T * K, OUT_PAD), np.float32)
    for k in range(D_OUT):
        mean_np[np.arange(T) * K + k, k] = 1.0 / (NUM_LAYERS * T)
    mean_mat = jnp.asarray(mean_np, jnp.bfloat16)

    layers = []
    src_dims = [D_IN]                     # row split of each layer's selector matrix
    for lp in params["layers"]:
        sel = sparsemax(lp["sel_logits"], axis=0)                         # [d, T, depth]
        inv_t = jnp.exp(-lp["log_temps"])                                 # [T, depth]
        sel_scaled = sel * inv_t[None]                                    # fold temperature
        thr_scaled = lp["thresholds"] * inv_t                             # [T, depth]
        d = sel.shape[0]

        # selector with 0.5*(1-2*code) folded in; lane layout (depth, tree_pad, leaf)
        sel_dt = jnp.transpose(sel_scaled, (0, 2, 1))                     # [d, depth, T]
        sel_lane = sel_dt[:, :, :, None] * sign[None, :, None, :]         # [d, depth, T, C]
        sel_lane = jnp.pad(sel_lane, ((0, 0), (0, 0), (0, T_PAD - T), (0, 0)))
        sel_tiled = sel_lane.reshape(d, L_LANES)

        # bias = 0.5 - 0.5*(1-2*code)*thr for real trees; 0 for padded trees (-> g=0)
        thr_dt = jnp.transpose(thr_scaled, (1, 0))                        # [depth, T]
        bias_lane = 0.5 - thr_dt[:, :, None] * sign[:, None, :]           # [depth, T, C]
        bias_lane = jnp.pad(bias_lane, ((0, 0), (0, T_PAD - T), (0, 0)))
        bias_tiled = bias_lane.reshape(1, L_LANES)

        # split selector rows per dense-connection source ([x, h_0, h_1, ...])
        pieces, r0 = [], 0
        for sd in src_dims:
            pieces.append(sel_tiled[r0:r0 + sd].astype(jnp.bfloat16))
            r0 += sd

        # block-diagonal response matrix [GROUP, T*K]; padded-tree rows are zero
        resp_t = jnp.transpose(lp["response"], (0, 2, 1))                 # [T, C, K]
        eye_t = jnp.eye(T, dtype=jnp.float32)
        respmat = (eye_t[:, None, :, None] * resp_t[:, :, None, :]).reshape(T * C, T * K)
        respmat = jnp.pad(respmat, ((0, (T_PAD - T) * C), (0, 0)))

        layers.append(dict(sel_pieces=pieces,
                           bias=bias_tiled.astype(jnp.float32),
                           respmat=respmat.astype(jnp.bfloat16)))
        src_dims.append(T * K)
    return dict(mean_mat=mean_mat, layers=layers)


# ----------------------------- NODE forward ----------------------------------
def node_forward(params, packed, x_num, x_cat):
    # TODO(synk): embedding gather left in plain JAX (data-dependent gather).
    emb = jnp.take(params["cat_emb"], x_cat + params["cat_offsets"][None], axis=0)
    x = jnp.concatenate([x_num, emb.reshape(x_num.shape[0], -1)], axis=-1)
    out = node_block_forward(x, packed)                                   # [B, D_OUT]
    return out.squeeze(-1) if out.shape[-1] == 1 else out                 # torch .squeeze(-1)


# ----------------------------- pure-JAX reference ----------------------------
def _odst_reference(x, lp):
    sel = sparsemax(lp["sel_logits"], axis=0)
    fv = jnp.einsum('bi,ind->bnd', x, sel)
    tl = (fv - lp["thresholds"][None]) * jnp.exp(-lp["log_temps"])[None]
    tl2 = jnp.stack([-tl, tl], axis=-1)
    bins = jnp.clip(0.5 * tl2 + 0.5, 0.0, 1.0)                            # sparsemoid
    codes = _bin_codes()
    codes_1hot = jnp.stack([codes, 1.0 - codes], axis=-1)                 # [depth, C, 2]
    bin_matches = jnp.einsum('btds,dcs->btdc', bins, codes_1hot)
    rw = jnp.prod(bin_matches, axis=-2)
    resp = jnp.einsum('bnd,ncd->bnc', rw, lp["response"])
    return resp.reshape(x.shape[0], -1)


def node_forward_ref(params, x_num, x_cat):
    emb = jnp.take(params["cat_emb"], x_cat + params["cat_offsets"][None], axis=0)
    x = jnp.concatenate([x_num, emb.reshape(x_num.shape[0], -1)], axis=-1)
    feat = x
    outs = []
    for lp in params["layers"]:
        h = _odst_reference(feat, lp)
        outs.append(h)
        feat = jnp.concatenate([feat, h], axis=-1)
    block_out = jnp.concatenate(outs, axis=-1).reshape(
        x.shape[0], NUM_LAYERS * LAYER_DIM, TREE_DIM)
    out = jnp.mean(block_out[..., :D_OUT], axis=-2)
    return out.squeeze(-1) if out.shape[-1] == 1 else out


# ----------------------------- main ------------------------------------------
if __name__ == "__main__":
    key = jax.random.PRNGKey(0)
    kp, kx, kc = jax.random.split(key, 3)
    params = init_params(kp)
    packed = pack_params(params)          # param-only preprocessing, hoisted out of forward

    x_num = jax.random.normal(kx, (BATCH, D_NUM), jnp.float32)
    cat_keys = jax.random.split(kc, len(CATEGORIES))
    x_cat = jnp.stack(
        [jax.random.randint(k, (BATCH,), 0, n, jnp.int32)
         for k, n in zip(cat_keys, CATEGORIES)], axis=1)                  # [B, n_cat]

    out = jax.jit(node_forward)(params, packed, x_num, x_cat)
    out = jax.block_until_ready(out)

    ref = node_forward_ref(params, x_num, x_cat)
    # bf16 MXU operands (f32 accumulation) -> slightly looser tolerance than pure f32
    np.testing.assert_allclose(np.asarray(out), np.asarray(ref), rtol=2e-2, atol=2e-2)
    print("KERNEL_OK")
</pallas_src>

<mosaic_0001>
module attributes {stable_mosaic.version = 11 : i64} {
  func.func @kernel(%arg0: i32, %arg1: memref<256x16xbf16, #tpu.memory_space<vmem>>, %arg2: memref<16x128xbf16, #tpu.memory_space<vmem>>, %arg3: memref<16x384xbf16, #tpu.memory_space<vmem>>, %arg4: memref<1x384xf32, #tpu.memory_space<vmem>>, %arg5: memref<128x16xbf16, #tpu.memory_space<vmem>>, %arg6: memref<16x384xbf16, #tpu.memory_space<vmem>>, %arg7: memref<16x384xbf16, #tpu.memory_space<vmem>>, %arg8: memref<1x384xf32, #tpu.memory_space<vmem>>, %arg9: memref<128x16xbf16, #tpu.memory_space<vmem>>, %arg10: memref<256x128xf32, #tpu.memory_space<vmem>>) attributes {dimension_semantics = [#tpu.dimension_semantics<arbitrary>], iteration_bounds = array<i64: 1>, scalar_prefetch = 0 : i64, scratch_operands = 0 : i64, tpu.core_type = #tpu.core_type<tc>, window_params = [{transform_indices = @transform_0, window_bounds = array<i64: 256, 16>}, {pipeline_mode = #tpu.pipeline_mode<synchronous>, transform_indices = @transform_1, window_bounds = array<i64: 16, 128>}, {pipeline_mode = #tpu.pipeline_mode<synchronous>, transform_indices = @transform_2, window_bounds = array<i64: 16, 384>}, {pipeline_mode = #tpu.pipeline_mode<synchronous>, transform_indices = @transform_3, window_bounds = array<i64: 1, 384>}, {pipeline_mode = #tpu.pipeline_mode<synchronous>, transform_indices = @transform_4, window_bounds = array<i64: 128, 16>}, {pipeline_mode = #tpu.pipeline_mode<synchronous>, transform_indices = @transform_5, window_bounds = array<i64: 16, 384>}, {pipeline_mode = #tpu.pipeline_mode<synchronous>, transform_indices = @transform_6, window_bounds = array<i64: 16, 384>}, {pipeline_mode = #tpu.pipeline_mode<synchronous>, transform_indices = @transform_7, window_bounds = array<i64: 1, 384>}, {pipeline_mode = #tpu.pipeline_mode<synchronous>, transform_indices = @transform_8, window_bounds = array<i64: 128, 16>}, {transform_indices = @transform_9, window_bounds = array<i64: 256, 128>}]} {
    %c0 = arith.constant 0 : index
    %c0_0 = arith.constant 0 : index
    %0 = vector.load %arg1[%c0, %c0_0] : memref<256x16xbf16, #tpu.memory_space<vmem>>, vector<256x16xbf16>
    %c0_1 = arith.constant 0 : index
    %c0_2 = arith.constant 0 : index
    %1 = vector.load %arg3[%c0_1, %c0_2] : memref<16x384xbf16, #tpu.memory_space<vmem>>, vector<16x384xbf16>
    %cst = arith.constant dense<0.000000e+00> : vector<256x384xf32>
    %2 = tpu.matmul %0, %1, %cst {dimension_numbers = #tpu.dot_dimension_numbers<[1], [0], [0], [1], [0, 0, 1, 1], [], []>} : vector<256x16xbf16>, vector<16x384xbf16>, vector<256x384xf32> -> vector<256x384xf32>
    %c0_3 = arith.constant 0 : index
    %c0_4 = arith.constant 0 : index
    %3 = vector.load %arg4[%c0_3, %c0_4] : memref<1x384xf32, #tpu.memory_space<vmem>>, vector<1x384xf32>
    %4 = vector.broadcast %3 : vector<1x384xf32> to vector<256x384xf32>
    %5 = arith.addf %2, %4 : vector<256x384xf32>
    %cst_5 = arith.constant 0.000000e+00 : f32
    %cst_6 = arith.constant 1.000000e+00 : f32
    %6 = vector.broadcast %cst_5 : f32 to vector<256x384xf32>
    %7 = arith.maximumf %6, %5 : vector<256x384xf32>
    %8 = vector.broadcast %cst_6 : f32 to vector<256x384xf32>
    %9 = arith.minimumf %8, %7 : vector<256x384xf32>
    %10 = vector.extract_strided_slice %9 {offsets = [0, 0], sizes = [256, 128], strides = [1, 1]} : vector<256x384xf32> to vector<256x128xf32>
    %11 = vector.extract_strided_slice %9 {offsets = [0, 128], sizes = [256, 128], strides = [1, 1]} : vector<256x384xf32> to vector<256x128xf32>
    %12 = arith.mulf %10, %11 : vector<256x128xf32>
    %13 = vector.extract_strided_slice %9 {offsets = [0, 256], sizes = [256, 128], strides = [1, 1]} : vector<256x384xf32> to vector<256x128xf32>
    %14 = arith.mulf %12, %13 : vector<256x128xf32>
    %15 = arith.truncf %14 : vector<256x128xf32> to vector<256x128xbf16>
    %c0_7 = arith.constant 0 : index
    %c0_8 = arith.constant 0 : index
    %16 = vector.load %arg5[%c0_7, %c0_8] : memref<128x16xbf16, #tpu.memory_space<vmem>>, vector<128x16xbf16>
    %cst_9 = arith.constant dense<0.000000e+00> : vector<256x16xf32>
    %17 = tpu.matmul %15, %16, %cst_9 {dimension_numbers = #tpu.dot_dimension_numbers<[1], [0], [0], [1], [0, 0, 1, 1], [], []>} : vector<256x128xbf16>, vector<128x16xbf16>, vector<256x16xf32> -> vector<256x16xf32>
    %18 = arith.truncf %17 : vector<256x16xf32> to vector<256x16xbf16>
    %c0_10 = arith.constant 0 : index
    %c0_11 = arith.constant 0 : index
    %19 = vector.load %arg6[%c0_10, %c0_11] : memref<16x384xbf16, #tpu.memory_space<vmem>>, vector<16x384xbf16>
    %cst_12 = arith.constant dense<0.000000e+00> : vector<256x384xf32>
    %20 = tpu.matmul %0, %19, %cst_12 {dimension_numbers = #tpu.dot_dimension_numbers<[1], [0], [0], [1], [0, 0, 1, 1], [], []>} : vector<256x16xbf16>, vector<16x384xbf16>, vector<256x384xf32> -> vector<256x384xf32>
    %c0_13 = arith.constant 0 : index
    %c0_14 = arith.constant 0 : index
    %21 = vector.load %arg7[%c0_13, %c0_14] : memref<16x384xbf16, #tpu.memory_space<vmem>>, vector<16x384xbf16>
    %cst_15 = arith.constant dense<0.000000e+00> : vector<256x384xf32>
    %22 = tpu.matmul %18, %21, %cst_15 {dimension_numbers = #tpu.dot_dimension_numbers<[1], [0], [0], [1], [0, 0, 1, 1], [], []>} : vector<256x16xbf16>, vector<16x384xbf16>, vector<256x384xf32> -> vector<256x384xf32>
    %23 = arith.addf %20, %22 : vector<256x384xf32>
    %c0_16 = arith.constant 0 : index
    %c0_17 = arith.constant 0 : index
    %24 = vector.load %arg8[%c0_16, %c0_17] : memref<1x384xf32, #tpu.memory_space<vmem>>, vector<1x384xf32>
    %25 = vector.broadcast %24 : vector<1x384xf32> to vector<256x384xf32>
    %26 = arith.addf %23, %25 : vector<256x384xf32>
    %cst_18 = arith.constant 0.000000e+00 : f32
    %cst_19 = arith.constant 1.000000e+00 : f32
    %27 = vector.broadcast %cst_18 : f32 to vector<256x384xf32>
    %28 = arith.maximumf %27, %26 : vector<256x384xf32>
    %29 = vector.broadcast %cst_19 : f32 to vector<256x384xf32>
    %30 = arith.minimumf %29, %28 : vector<256x384xf32>
    %31 = vector.extract_strided_slice %30 {offsets = [0, 0], sizes = [256, 128], strides = [1, 1]} : vector<256x384xf32> to vector<256x128xf32>
    %32 = vector.extract_strided_slice %30 {offsets = [0, 128], sizes = [256, 128], strides = [1, 1]} : vector<256x384xf32> to vector<256x128xf32>
    %33 = arith.mulf %31, %32 : vector<256x128xf32>
    %34 = vector.extract_strided_slice %30 {offsets = [0, 256], sizes = [256, 128], strides = [1, 1]} : vector<256x384xf32> to vector<256x128xf32>
    %35 = arith.mulf %33, %34 : vector<256x128xf32>
    %36 = arith.truncf %35 : vector<256x128xf32> to vector<256x128xbf16>
    %c0_20 = arith.constant 0 : index
    %c0_21 = arith.constant 0 : index
    %37 = vector.load %arg9[%c0_20, %c0_21] : memref<128x16xbf16, #tpu.memory_space<vmem>>, vector<128x16xbf16>
    %cst_22 = arith.constant dense<0.000000e+00> : vector<256x16xf32>
    %38 = tpu.matmul %36, %37, %cst_22 {dimension_numbers = #tpu.dot_dimension_numbers<[1], [0], [0], [1], [0, 0, 1, 1], [], []>} : vector<256x128xbf16>, vector<128x16xbf16>, vector<256x16xf32> -> vector<256x16xf32>
    %39 = arith.addf %17, %38 : vector<256x16xf32>
    %40 = arith.truncf %39 : vector<256x16xf32> to vector<256x16xbf16>
    %c0_23 = arith.constant 0 : index
    %c0_24 = arith.constant 0 : index
    %41 = vector.load %arg2[%c0_23, %c0_24] : memref<16x128xbf16, #tpu.memory_space<vmem>>, vector<16x128xbf16>
    %cst_25 = arith.constant dense<0.000000e+00> : vector<256x128xf32>
    %42 = tpu.matmul %40, %41, %cst_25 {dimension_numbers = #tpu.dot_dimension_numbers<[1], [0], [0], [1], [0, 0, 1, 1], [], []>} : vector<256x16xbf16>, vector<16x128xbf16>, vector<256x128xf32> -> vector<256x128xf32>
    %c0_26 = arith.constant 0 : index
    %c0_27 = arith.constant 0 : index
    %43 = vector.load %arg10[%c0_26, %c0_27] : memref<256x128xf32, #tpu.memory_space<vmem>>, vector<256x128xf32>
    tpu.vector_store %arg10[%c0_26, %c0_27], %42 {strides = array<i32>} : memref<256x128xf32, #tpu.memory_space<vmem>>, vector<256x128xf32>,
    return
  }
  func.func @transform_0(%arg0: i32) -> (i32, i32) {
    %c0_i32 = arith.constant 0 : i32
    %c0_i32_0 = arith.constant 0 : i32
    return %arg0, %c0_i32 : i32, i32
  }
  func.func @transform_1(%arg0: i32) -> (i32, i32) {
    %c0_i32 = arith.constant 0 : i32
    %c0_i32_0 = arith.constant 0 : i32
    %c0_i32_1 = arith.constant 0 : i32
    return %c0_i32, %c0_i32_0 : i32, i32
  }
  func.func @transform_2(%arg0: i32) -> (i32, i32) {
    %c0_i32 = arith.constant 0 : i32
    %c0_i32_0 = arith.constant 0 : i32
    %c0_i32_1 = arith.constant 0 : i32
    return %c0_i32, %c0_i32_0 : i32, i32
  }
  func.func @transform_3(%arg0: i32) -> (i32, i32) {
    %c0_i32 = arith.constant 0 : i32
    %c0_i32_0 = arith.constant 0 : i32
    %c0_i32_1 = arith.constant 0 : i32
    return %c0_i32, %c0_i32_0 : i32, i32
  }
  func.func @transform_4(%arg0: i32) -> (i32, i32) {
    %c0_i32 = arith.constant 0 : i32
    %c0_i32_0 = arith.constant 0 : i32
    %c0_i32_1 = arith.constant 0 : i32
    return %c0_i32, %c0_i32_0 : i32, i32
  }
  func.func @transform_5(%arg0: i32) -> (i32, i32) {
    %c0_i32 = arith.constant 0 : i32
    %c0_i32_0 = arith.constant 0 : i32
    %c0_i32_1 = arith.constant 0 : i32
    return %c0_i32, %c0_i32_0 : i32, i32
  }
  func.func @transform_6(%arg0: i32) -> (i32, i32) {
    %c0_i32 = arith.constant 0 : i32
    %c0_i32_0 = arith.constant 0 : i32
    %c0_i32_1 = arith.constant 0 : i32
    return %c0_i32, %c0_i32_0 : i32, i32
  }
  func.func @transform_7(%arg0: i32) -> (i32, i32) {
    %c0_i32 = arith.constant 0 : i32
    %c0_i32_0 = arith.constant 0 : i32
    %c0_i32_1 = arith.constant 0 : i32
    return %c0_i32, %c0_i32_0 : i32, i32
  }
  func.func @transform_8(%arg0: i32) -> (i32, i32) {
    %c0_i32 = arith.constant 0 : i32
    %c0_i32_0 = arith.constant 0 : i32
    %c0_i32_1 = arith.constant 0 : i32
    return %c0_i32, %c0_i32_0 : i32, i32
  }
  func.func @transform_9(%arg0: i32) -> (i32, i32) {
    %c0_i32 = arith.constant 0 : i32
    %c0_i32_0 = arith.constant 0 : i32
    return %arg0, %c0_i32 : i32, i32
  }
}

</mosaic_0001>

<llo_original>
// kernel: node_forward.1
$region0: #{node_forward.1}
  #allocation0 [shape = 'u32[]', space=smem, size = 0x4, offset = 0x4, fixed_abs, tag = 'smem constant byte address 0x4 - core index']
  #allocation1 [shape = 'u32[144,128]{1,0:T(1,128)}', space=vmem, size = 0x12000, scoped, tag = 'internal scratch']
  %s0 = inlined_call_operand.vmem [shape: bf16[256,16], index: 0, kind: input, shape index: {}]
  %s1 = inlined_call_operand.vmem [shape: bf16[16,128], index: 1, kind: input, shape index: {}]
  %s2 = inlined_call_operand.vmem [shape: bf16[16,384], index: 2, kind: input, shape index: {}]
  %s3 = inlined_call_operand.vmem [shape: f32[1,384], index: 3, kind: input, shape index: {}]
  %s4 = inlined_call_operand.vmem [shape: bf16[128,16], index: 4, kind: input, shape index: {}]
  %s5 = inlined_call_operand.vmem [shape: bf16[16,384], index: 5, kind: input, shape index: {}]
  %s6 = inlined_call_operand.vmem [shape: bf16[16,384], index: 6, kind: input, shape index: {}]
  %s7 = inlined_call_operand.vmem [shape: f32[1,384], index: 7, kind: input, shape index: {}]
  %s8 = inlined_call_operand.vmem [shape: bf16[128,16], index: 8, kind: input, shape index: {}]
  %s9 = inlined_call_operand.vmem [shape: f32[256,128], index: 9, kind: output, shape index: {}]
  %s10 = sld [smem:[#allocation0]]
  $region46: #{node_forward.1} parent=0
    _
  %s12 = ssub.s32 1, %s10
  %s13 = scalar_select 0, %s12, %s10
  // Predicated region
  $region2: #{node_forward.1} parent=0 // pred_check
    _
  $region3: #{node_forward.1} parent=0 // pred_check_branch
    %15 = sbr.rel (0) target = $region5
  $region4: #{node_forward.1} parent=0 // pred_region
    _
  $region5: #{node_forward.1} parent=0 // pred_fallthru
    _
  // Predicated region
  $region6: #{node_forward.1} parent=0 // pred_check
    _
  $region7: #{node_forward.1} parent=0 // pred_check_branch
    %17 = sbr.rel (0) target = $region9
  $region8: #{node_forward.1} parent=0 // pred_region
    _
  $region9: #{node_forward.1} parent=0 // pred_fallthru
    _
  // Predicated region
  $region10: #{node_forward.1} parent=0 // pred_check
    _
  $region11: #{node_forward.1} parent=0 // pred_check_branch
    %19 = sbr.rel (0) target = $region13
  $region12: #{node_forward.1} parent=0 // pred_region
    _
  $region13: #{node_forward.1} parent=0 // pred_fallthru
    _
  // Predicated region
  $region14: #{node_forward.1} parent=0 // pred_check
    _
  $region15: #{node_forward.1} parent=0 // pred_check_branch
    %21 = sbr.rel (0) target = $region17
  $region16: #{node_forward.1} parent=0 // pred_region
    _
  $region17: #{node_forward.1} parent=0 // pred_fallthru
    _
  // Predicated region
  $region18: #{node_forward.1} parent=0 // pred_check
    _
  $region19: #{node_forward.1} parent=0 // pred_check_branch
    %23 = sbr.rel (0) target = $region21
  $region20: #{node_forward.1} parent=0 // pred_region
    _
  $region21: #{node_forward.1} parent=0 // pred_fallthru
    _
  // Predicated region
  $region22: #{node_forward.1} parent=0 // pred_check
    _
  $region23: #{node_forward.1} parent=0 // pred_check_branch
    %25 = sbr.rel (0) target = $region25
  $region24: #{node_forward.1} parent=0 // pred_region
    _
  $region25: #{node_forward.1} parent=0 // pred_fallthru
    _
  // Predicated region
  $region26: #{node_forward.1} parent=0 // pred_check
    _
  $region27: #{node_forward.1} parent=0 // pred_check_branch
    %27 = sbr.rel (0) target = $region29
  $region28: #{node_forward.1} parent=0 // pred_region
    _
  $region29: #{node_forward.1} parent=0 // pred_fallthru
    _
  // Predicated region
  $region30: #{node_forward.1} parent=0 // pred_check
    _
  $region31: #{node_forward.1} parent=0 // pred_check_branch
    %29 = sbr.rel (0) target = $region33
  $region32: #{node_forward.1} parent=0 // pred_region
    _
  $region33: #{node_forward.1} parent=0 // pred_fallthru
    _
  // Predicated region
  $region34: #{node_forward.1} parent=0 // pred_check
    _
  $region35: #{node_forward.1} parent=0 // pred_check_branch
    %31 = sbr.rel (0) target = $region37
  $region36: #{node_forward.1} parent=0 // pred_region
    _
  $region37: #{node_forward.1} parent=0 // pred_fallthru
    _
  %v33 = vld [vmem:[%s0] sm:$0xf]
  %v34 = vld [vmem:[%s0 + $0x4] sm:$0xf]
  %v35 = vld [vmem:[%s0 + $0x8] sm:$0xf]
  %v36 = vld [vmem:[%s0 + $0xc] sm:$0xf]
  %v37 = vld [vmem:[%s0 + $0x10] sm:$0xf]
  %v38 = vld [vmem:[%s0 + $0x14] sm:$0xf]
  %v39 = vld [vmem:[%s0 + $0x18] sm:$0xf]
  %v40 = vld [vmem:[%s0 + $0x1c] sm:$0xf]
  %v41 = vld [vmem:[%s0 + $0x20] sm:$0xf]
  %v42 = vld [vmem:[%s0 + $0x24] sm:$0xf]
  %v43 = vld [vmem:[%s0 + $0x28] sm:$0xf]
  %v44 = vld [vmem:[%s0 + $0x2c] sm:$0xf]
  %v45 = vld [vmem:[%s0 + $0x30] sm:$0xf]
  %v46 = vld [vmem:[%s0 + $0x34] sm:$0xf]
  %v47 = vld [vmem:[%s0 + $0x38] sm:$0xf]
  %v48 = vld [vmem:[%s0 + $0x3c] sm:$0xf]
  %v49 = vld [vmem:[%s0 + $0x40] sm:$0xf]
  %v50 = vld [vmem:[%s0 + $0x44] sm:$0xf]
  %v51 = vld [vmem:[%s0 + $0x48] sm:$0xf]
  %v52 = vld [vmem:[%s0 + $0x4c] sm:$0xf]
  %v53 = vld [vmem:[%s0 + $0x50] sm:$0xf]
  %v54 = vld [vmem:[%s0 + $0x54] sm:$0xf]
  %v55 = vld [vmem:[%s0 + $0x58] sm:$0xf]
  %v56 = vld [vmem:[%s0 + $0x5c] sm:$0xf]
  %v57 = vld [vmem:[%s0 + $0x60] sm:$0xf]
  %v58 = vld [vmem:[%s0 + $0x64] sm:$0xf]
  %v59 = vld [vmem:[%s0 + $0x68] sm:$0xf]
  %v60 = vld [vmem:[%s0 + $0x6c] sm:$0xf]
  %v61 = vld [vmem:[%s0 + $0x70] sm:$0xf]
  %v62 = vld [vmem:[%s0 + $0x74] sm:$0xf]
  %v63 = vld [vmem:[%s0 + $0x78] sm:$0xf]
  %v64 = vld [vmem:[%s0 + $0x7c] sm:$0xf]
  %v65 = vld [vmem:[%s2] sm:$0xff]
  %v66 = vld [vmem:[%s2 + $0x8] sm:$0xf]
  %v67 = vld [vmem:[%s2 + $0xc] sm:$0xff]
  %v68 = vld [vmem:[%s2 + $0x14] sm:$0xf]
  %v69 = vld [vmem:[%s3] sm:$0x7]
  %v71 = vlaneseq
  %v72 = vshrl.u32 %v71, 7
  %v73 = vsub.s32 0, %v72
  %v74 = vrot.slane %v69, %v73
  %v75 = vlaneseq
  %v76 = vshrl.u32 %v75, 7
  %v77 = vsub.s32 1, %v76
  %v78 = vrot.slane %v69, %v77
  %v79 = vlaneseq
  %v80 = vshrl.u32 %v79, 7
  %v81 = vsub.s32 2, %v80
  %v82 = vrot.slane %v69, %v81
  %v118 = vunpack.c.l.b16 %v33
  %v119 = vunpack.c.l.b16 %v34
  %v120 = vunpack.c.l.b16 %v35
  %v121 = vunpack.c.l.b16 %v36
  %v122 = vunpack.c.l.b16 %v37
  %v123 = vunpack.c.l.b16 %v38
  %v124 = vunpack.c.l.b16 %v39
  %v125 = vunpack.c.l.b16 %v40
  %v126 = vunpack.c.l.b16 %v41
  %v127 = vunpack.c.l.b16 %v42
  %v128 = vunpack.c.l.b16 %v43
  %v129 = vunpack.c.l.b16 %v44
  %v130 = vunpack.c.l.b16 %v45
  %v131 = vunpack.c.l.b16 %v46
  %v132 = vunpack.c.l.b16 %v47
  %v133 = vunpack.c.l.b16 %v48
  %v134 = vunpack.c.l.b16 %v49
  %v135 = vunpack.c.l.b16 %v50
  %v136 = vunpack.c.l.b16 %v51
  %v137 = vunpack.c.l.b16 %v52
  %v138 = vunpack.c.l.b16 %v53
  %v139 = vunpack.c.l.b16 %v54
  %v140 = vunpack.c.l.b16 %v55
  %v141 = vunpack.c.l.b16 %v56
  %v142 = vunpack.c.l.b16 %v57
  %v143 = vunpack.c.l.b16 %v58
  %v144 = vunpack.c.l.b16 %v59
  %v145 = vunpack.c.l.b16 %v60
  %v146 = vunpack.c.l.b16 %v61
  %v147 = vunpack.c.l.b16 %v62
  %v148 = vunpack.c.l.b16 %v63
  %v149 = vunpack.c.l.b16 %v64
  %v150 = vpack.c.b16 %v119, %v118
  %v151 = vpack.c.b16 %v121, %v120
  %v152 = vpack.c.b16 %v123, %v122
  %v153 = vpack.c.b16 %v125, %v124
  %v154 = vpack.c.b16 %v127, %v126
  %v155 = vpack.c.b16 %v129, %v128
  %v156 = vpack.c.b16 %v131, %v130
  %v157 = vpack.c.b16 %v133, %v132
  %v158 = vpack.c.b16 %v135, %v134
  %v159 = vpack.c.b16 %v137, %v136
  %v160 = vpack.c.b16 %v139, %v138
  %v161 = vpack.c.b16 %v141, %v140
  %v162 = vpack.c.b16 %v143, %v142
  %v163 = vpack.c.b16 %v145, %v144
  %v164 = vpack.c.b16 %v147, %v146
  %v165 = vpack.c.b16 %v149, %v148
  %v170 = vunpack.c.l.b16 %v65
  %v171 = vunpack.c.h.b16 %v65
  %v172 = vunpack.c.l.b16 %v66
  %v173 = vunpack.c.l.b16 %v67
  %v174 = vunpack.c.h.b16 %v67
  %v175 = vunpack.c.l.b16 %v68
  %v176 = vpack.c.b16 %v173, %v170
  %v177 = vpack.c.b16 %v174, %v171
  %v178 = vpack.c.b16 %v175, %v172
  %vm182 = vcmask 130048
  %v184 = vsel %vm182, %v150, 0
  %v187 = vsel %vm182, %v151, 0
  %v190 = vsel %vm182, %v152, 0
  %v193 = vsel %vm182, %v153, 0
  %v196 = vsel %vm182, %v154, 0
  %v199 = vsel %vm182, %v155, 0
  %v202 = vsel %vm182, %v156, 0
  %v205 = vsel %vm182, %v157, 0
  %v208 = vsel %vm182, %v158, 0
  %v211 = vsel %vm182, %v159, 0
  %v214 = vsel %vm182, %v160, 0
  %v217 = vsel %vm182, %v161, 0
  %v220 = vsel %vm182, %v162, 0
  %v223 = vsel %vm182, %v163, 0
  %v226 = vsel %vm182, %v164, 0
  %v229 = vsel %vm182, %v165, 0
  %231 = vmatprep.subr.bf16.mxu0 %v177
  %232 = vmatpush1.bf16.msra.mxu0 %v176
  %233 = vmatprep.subr.bf16.mxu0 0
  %234 = vmatpush1.bf16.msra.mxu0 0
  %235 = vmatprep.subr.bf16.mxu0 0
  %236 = vmatpush1.bf16.msra.mxu0 0
  %237 = vmatprep.subr.bf16.mxu0 0
  %238 = vmatpush1.bf16.msra.mxu0 0
  %239 = vmatprep.subr.bf16.mxu0 0
  %240 = vmatpush1.bf16.msra.mxu0 0
  %241 = vmatprep.subr.bf16.mxu0 0
  %242 = vmatpush1.bf16.msra.mxu0 0
  %243 = vmatprep.subr.bf16.mxu0 0
  %244 = vmatpush1.bf16.msra.mxu0 0
  %245 = vmatprep.subr.bf16.mxu0 0
  %246 = vmatpush1.bf16.msra.mxu0 0
  %247 = vmatprep.subr.bf16.mxu0 0
  %248 = vmatpush1.bf16.msra.mxu0 0
  %249 = vmatprep.subr.bf16.mxu0 0
  %250 = vmatpush1.bf16.msra.mxu0 0
  %251 = vmatprep.subr.bf16.mxu0 0
  %252 = vmatpush1.bf16.msra.mxu0 0
  %253 = vmatprep.subr.bf16.mxu0 0
  %254 = vmatpush1.bf16.msra.mxu0 0
  %255 = vmatprep.subr.bf16.mxu0 0
  %256 = vmatpush1.bf16.msra.mxu0 0
  %257 = vmatprep.subr.bf16.mxu0 0
  %258 = vmatpush1.bf16.msra.mxu0 0
  %259 = vmatprep.subr.bf16.mxu0 0
  %260 = vmatpush1.bf16.msra.mxu0 0
  %261 = vmatprep.subr.bf16.mxu0 0
  %262 = vmatpush1.bf16.msra.mxu0 0
  %263 = vmatprep.mubr.bf16.mxu0 0
  %264 = vmatmul.mubr.bf16.gmra.mrb[0].mxu0 %v184
  %v265 = vpop.f32.mrb[0].mxu0
  %v266 = vadd.f32 %v74, %v265
  %v267 = vpop.f32.mrb[0].mxu0
  %v268 = vadd.f32 %v78, %v267
  %v269 = vpop.f32.mrb[0].mxu0
  %v270 = vadd.f32 %v74, %v269
  %v271 = vpop.f32.mrb[0].mxu0
  %v272 = vadd.f32 %v78, %v271
  %273 = vmatprep.mubr.bf16.mxu0 0
  %274 = vmatmul.mubr.bf16.gmra.mrb[0].mxu0 %v187
  %v275 = vpop.f32.mrb[0].mxu0
  %v276 = vadd.f32 %v74, %v275
  %v277 = vpop.f32.mrb[0].mxu0
  %v278 = vadd.f32 %v78, %v277
  %v279 = vpop.f32.mrb[0].mxu0
  %v280 = vadd.f32 %v74, %v279
  %v281 = vpop.f32.mrb[0].mxu0
  %v282 = vadd.f32 %v78, %v281
  %283 = vmatprep.mubr.bf16.mxu0 0
  %284 = vmatmul.mubr.bf16.gmra.mrb[0].mxu0 %v190
  %v285 = vpop.f32.mrb[0].mxu0
  %v286 = vadd.f32 %v74, %v285
  %v287 = vpop.f32.mrb[0].mxu0
  %v288 = vadd.f32 %v78, %v287
  %v289 = vpop.f32.mrb[0].mxu0
  %v290 = vadd.f32 %v74, %v289
  %v291 = vpop.f32.mrb[0].mxu0
  %v292 = vadd.f32 %v78, %v291
  %293 = vmatprep.mubr.bf16.mxu0 0
  %294 = vmatmul.mubr.bf16.gmra.mrb[0].mxu0 %v193
  %v295 = vpop.f32.mrb[0].mxu0
  %v296 = vadd.f32 %v74, %v295
  %v297 = vpop.f32.mrb[0].mxu0
  %v298 = vadd.f32 %v78, %v297
  %v299 = vpop.f32.mrb[0].mxu0
  %v300 = vadd.f32 %v74, %v299
  %v301 = vpop.f32.mrb[0].mxu0
  %v302 = vadd.f32 %v78, %v301
  %303 = vmatprep.mubr.bf16.mxu0 0
  %304 = vmatmul.mubr.bf16.gmra.mrb[0].mxu0 %v196
  %v305 = vpop.f32.mrb[0].mxu0
  %v306 = vadd.f32 %v74, %v305
  %v307 = vpop.f32.mrb[0].mxu0
  %v308 = vadd.f32 %v78, %v307
  %v309 = vpop.f32.mrb[0].mxu0
  %v310 = vadd.f32 %v74, %v309
  %v311 = vpop.f32.mrb[0].mxu0
  %v312 = vadd.f32 %v78, %v311
  %313 = vmatprep.mubr.bf16.mxu0 0
  %314 = vmatmul.mubr.bf16.gmra.mrb[0].mxu0 %v199
  %v315 = vpop.f32.mrb[0].mxu0
  %v316 = vadd.f32 %v74, %v315
  %v317 = vpop.f32.mrb[0].mxu0
  %v318 = vadd.f32 %v78, %v317
  %v319 = vpop.f32.mrb[0].mxu0
  %v320 = vadd.f32 %v74, %v319
  %v321 = vpop.f32.mrb[0].mxu0
  %v322 = vadd.f32 %v78, %v321
  %323 = vmatprep.mubr.bf16.mxu0 0
  %324 = vmatmul.mubr.bf16.gmra.mrb[0].mxu0 %v202
  %v325 = vpop.f32.mrb[0].mxu0
  %v326 = vadd.f32 %v74, %v325
  %v327 = vpop.f32.mrb[0].mxu0
  %v328 = vadd.f32 %v78, %v327
  %v329 = vpop.f32.mrb[0].mxu0
  %v330 = vadd.f32 %v74, %v329
  %v331 = vpop.f32.mrb[0].mxu0
  %v332 = vadd.f32 %v78, %v331
  %333 = vmatprep.mubr.bf16.mxu0 0
  %334 = vmatmul.mubr.bf16.gmra.mrb[0].mxu0 %v205
  %v335 = vpop.f32.mrb[0].mxu0
  %v336 = vadd.f32 %v74, %v335
  %v337 = vpop.f32.mrb[0].mxu0
  %v338 = vadd.f32 %v78, %v337
  %v339 = vpop.f32.mrb[0].mxu0
  %v340 = vadd.f32 %v74, %v339
  %v341 = vpop.f32.mrb[0].mxu0
  %v342 = vadd.f32 %v78, %v341
  %343 = vmatprep.mubr.bf16.mxu0 0
  %344 = vmatmul.mubr.bf16.gmra.mrb[0].mxu0 %v208
  %v345 = vpop.f32.mrb[0].mxu0
  %v346 = vadd.f32 %v74, %v345
  %v347 = vpop.f32.mrb[0].mxu0
  %v348 = vadd.f32 %v78, %v347
  %v349 = vpop.f32.mrb[0].mxu0
  %v350 = vadd.f32 %v74, %v349
  %v351 = vpop.f32.mrb[0].mxu0
  %v352 = vadd.f32 %v78, %v351
  %353 = vmatprep.mubr.bf16.mxu0 0
  %354 = vmatmul.mubr.bf16.gmra.mrb[0].mxu0 %v211
  %v355 = vpop.f32.mrb[0].mxu0
  %v356 = vadd.f32 %v74, %v355
  %v357 = vpop.f32.mrb[0].mxu0
  %v358 = vadd.f32 %v78, %v357
  %v359 = vpop.f32.mrb[0].mxu0
  %v360 = vadd.f32 %v74, %v359
  %v361 = vpop.f32.mrb[0].mxu0
  %v362 = vadd.f32 %v78, %v361
  %363 = vmatprep.mubr.bf16.mxu0 0
  %364 = vmatmul.mubr.bf16.gmra.mrb[0].mxu0 %v214
  %v365 = vpop.f32.mrb[0].mxu0
  %v366 = vadd.f32 %v74, %v365
  %v367 = vpop.f32.mrb[0].mxu0
  %v368 = vadd.f32 %v78, %v367
  %v369 = vpop.f32.mrb[0].mxu0
  %v370 = vadd.f32 %v74, %v369
  %v371 = vpop.f32.mrb[0].mxu0
  %v372 = vadd.f32 %v78, %v371
  %373 = vmatprep.mubr.bf16.mxu0 0
  %374 = vmatmul.mubr.bf16.gmra.mrb[0].mxu0 %v217
  %v375 = vpop.f32.mrb[0].mxu0
  %v376 = vadd.f32 %v74, %v375
  %v377 = vpop.f32.mrb[0].mxu0
  %v378 = vadd.f32 %v78, %v377
  %v379 = vpop.f32.mrb[0].mxu0
  %v380 = vadd.f32 %v74, %v379
  %v381 = vpop.f32.mrb[0].mxu0
  %v382 = vadd.f32 %v78, %v381
  %383 = vmatprep.mubr.bf16.mxu0 0
  %384 = vmatmul.mubr.bf16.gmra.mrb[0].mxu0 %v220
  %v385 = vpop.f32.mrb[0].mxu0
  %v386 = vadd.f32 %v74, %v385
  %v387 = vpop.f32.mrb[0].mxu0
  %v388 = vadd.f32 %v78, %v387
  %v389 = vpop.f32.mrb[0].mxu0
  %v390 = vadd.f32 %v74, %v389
  %v391 = vpop.f32.mrb[0].mxu0
  %v392 = vadd.f32 %v78, %v391
  %393 = vmatprep.mubr.bf16.mxu0 0
  %394 = vmatmul.mubr.bf16.gmra.mrb[0].mxu0 %v223
  %v395 = vpop.f32.mrb[0].mxu0
  %v396 = vadd.f32 %v74, %v395
  %v397 = vpop.f32.mrb[0].mxu0
  %v398 = vadd.f32 %v78, %v397
  %v399 = vpop.f32.mrb[0].mxu0
  %v400 = vadd.f32 %v74, %v399
  %v401 = vpop.f32.mrb[0].mxu0
  %v402 = vadd.f32 %v78, %v401
  %403 = vmatprep.mubr.bf16.mxu0 0
  %404 = vmatmul.mubr.bf16.gmra.mrb[0].mxu0 %v226
  %v405 = vpop.f32.mrb[0].mxu0
  %v406 = vadd.f32 %v74, %v405
  %v407 = vpop.f32.mrb[0].mxu0
  %v408 = vadd.f32 %v78, %v407
  %v409 = vpop.f32.mrb[0].mxu0
  %v410 = vadd.f32 %v74, %v409
  %v411 = vpop.f32.mrb[0].mxu0
  %v412 = vadd.f32 %v78, %v411
  %413 = vmatprep.mubr.bf16.mxu0 0
  %414 = vmatmul.mubr.bf16.gmra.mrb[0].mxu0 %v229
  %v415 = vpop.f32.mrb[0].mxu0
  %v416 = vadd.f32 %v74, %v415
  %v417 = vpop.f32.mrb[0].mxu0
  %v418 = vadd.f32 %v78, %v417
  %v419 = vpop.f32.mrb[0].mxu0
  %v420 = vadd.f32 %v74, %v419
  %v421 = vpop.f32.mrb[0].mxu0
  %v422 = vadd.f32 %v78, %v421
  %423 = vdwg.mxu0
  %424 = vmatprep.subr.bf16.mxu0 0
  %425 = vmatpush1.bf16.msra.mxu0 %v178
  %426 = vmatprep.subr.bf16.mxu0 0
  %427 = vmatpush1.bf16.msra.mxu0 0
  %428 = vmatprep.subr.bf16.mxu0 0
  %429 = vmatpush1.bf16.msra.mxu0 0
  %430 = vmatprep.subr.bf16.mxu0 0
  %431 = vmatpush1.bf16.msra.mxu0 0
  %432 = vmatprep.subr.bf16.mxu0 0
  %433 = vmatpush1.bf16.msra.mxu0 0
  %434 = vmatprep.subr.bf16.mxu0 0
  %435 = vmatpush1.bf16.msra.mxu0 0
  %436 = vmatprep.subr.bf16.mxu0 0
  %437 = vmatpush1.bf16.msra.mxu0 0
  %438 = vmatprep.subr.bf16.mxu0 0
  %439 = vmatpush1.bf16.msra.mxu0 0
  %440 = vmatprep.subr.bf16.mxu0 0
  %441 = vmatpush1.bf16.msra.mxu0 0
  %442 = vmatprep.subr.bf16.mxu0 0
  %443 = vmatpush1.bf16.msra.mxu0 0
  %444 = vmatprep.subr.bf16.mxu0 0
  %445 = vmatpush1.bf16.msra.mxu0 0
  %446 = vmatprep.subr.bf16.mxu0 0
  %447 = vmatpush1.bf16.msra.mxu0 0
  %448 = vmatprep.subr.bf16.mxu0 0
  %449 = vmatpush1.bf16.msra.mxu0 0
  %450 = vmatprep.subr.bf16.mxu0 0
  %451 = vmatpush1.bf16.msra.mxu0 0
  %452 = vmatprep.subr.bf16.mxu0 0
  %453 = vmatpush1.bf16.msra.mxu0 0
  %454 = vmatprep.subr.bf16.mxu0 0
  %455 = vmatpush1.bf16.msra.mxu0 0
  %456 = vmatprep.mubr.bf16.mxu0 0
  %457 = vmatmul.mubr.bf16.gmra.mrb[0].mxu0 %v184
  %v458 = vpop.f32.mrb[0].mxu0
  %v459 = vadd.f32 %v82, %v458
  %v460 = vpop.f32.mrb[0].mxu0
  %v461 = vpop.f32.mrb[0].mxu0
  %v462 = vadd.f32 %v82, %v461
  %v463 = vpop.f32.mrb[0].mxu0
  %464 = vmatprep.mubr.bf16.mxu0 0
  %465 = vmatmul.mubr.bf16.gmra.mrb[0].mxu0 %v187
  %v466 = vpop.f32.mrb[0].mxu0
  %v467 = vadd.f32 %v82, %v466
  %v468 = vpop.f32.mrb[0].mxu0
  %v469 = vpop.f32.mrb[0].mxu0
  %v470 = vadd.f32 %v82, %v469
  %v471 = vpop.f32.mrb[0].mxu0
  %472 = vmatprep.mubr.bf16.mxu0 0
  %473 = vmatmul.mubr.bf16.gmra.mrb[0].mxu0 %v190
  %v474 = vpop.f32.mrb[0].mxu0
  %v475 = vadd.f32 %v82, %v474
  %v476 = vpop.f32.mrb[0].mxu0
  %v477 = vpop.f32.mrb[0].mxu0
  %v478 = vadd.f32 %v82, %v477
  %v479 = vpop.f32.mrb[0].mxu0
  %480 = vmatprep.mubr.bf16.mxu0 0
  %481 = vmatmul.mubr.bf16.gmra.mrb[0].mxu0 %v193
  %v482 = vpop.f32.mrb[0].mxu0
  %v483 = vadd.f32 %v82, %v482
  %v484 = vpop.f32.mrb[0].mxu0
  %v485 = vpop.f32.mrb[0].mxu0
  %v486 = vadd.f32 %v82, %v485
  %v487 = vpop.f32.mrb[0].mxu0
  %488 = vmatprep.mubr.bf16.mxu0 0
  %489 = vmatmul.mubr.bf16.gmra.mrb[0].mxu0 %v196
  %v490 = vpop.f32.mrb[0].mxu0
  %v491 = vadd.f32 %v82, %v490
  %v492 = vpop.f32.mrb[0].mxu0
  %v493 = vpop.f32.mrb[0].mxu0
  %v494 = vadd.f32 %v82, %v493
  %v495 = vpop.f32.mrb[0].mxu0
  %496 = vmatprep.mubr.bf16.mxu0 0
  %497 = vmatmul.mubr.bf16.gmra.mrb[0].mxu0 %v199
  %v498 = vpop.f32.mrb[0].mxu0
  %v499 = vadd.f32 %v82, %v498
  %v500 = vpop.f32.mrb[0].mxu0
  %v501 = vpop.f32.mrb[0].mxu0
  %v502 = vadd.f32 %v82, %v501
  %v503 = vpop.f32.mrb[0].mxu0
  %504 = vmatprep.mubr.bf16.mxu0 0
  %505 = vmatmul.mubr.bf16.gmra.mrb[0].mxu0 %v202
  %v506 = vpop.f32.mrb[0].mxu0
  %v507 = vadd.f32 %v82, %v506
  %v508 = vpop.f32.mrb[0].mxu0
  %v509 = vpop.f32.mrb[0].mxu0
  %v510 = vadd.f32 %v82, %v509
  %v511 = vpop.f32.mrb[0].mxu0
  %512 = vmatprep.mubr.bf16.mxu0 0
  %513 = vmatmul.mubr.bf16.gmra.mrb[0].mxu0 %v205
  %v514 = vpop.f32.mrb[0].mxu0
  %v515 = vadd.f32 %v82, %v514
  %v516 = vpop.f32.mrb[0].mxu0
  %v517 = vpop.f32.mrb[0].mxu0
  %v518 = vadd.f32 %v82, %v517
  %v519 = vpop.f32.mrb[0].mxu0
  %520 = vmatprep.mubr.bf16.mxu0 0
  %521 = vmatmul.mubr.bf16.gmra.mrb[0].mxu0 %v208
  %v522 = vpop.f32.mrb[0].mxu0
  %v523 = vadd.f32 %v82, %v522
  %v524 = vpop.f32.mrb[0].mxu0
  %v525 = vpop.f32.mrb[0].mxu0
  %v526 = vadd.f32 %v82, %v525
  %v527 = vpop.f32.mrb[0].mxu0
  %528 = vmatprep.mubr.bf16.mxu0 0
  %529 = vmatmul.mubr.bf16.gmra.mrb[0].mxu0 %v211
  %v530 = vpop.f32.mrb[0].mxu0
  %v531 = vadd.f32 %v82, %v530
  %v532 = vpop.f32.mrb[0].mxu0
  %v533 = vpop.f32.mrb[0].mxu0
  %v534 = vadd.f32 %v82, %v533
  %v535 = vpop.f32.mrb[0].mxu0
  %536 = vmatprep.mubr.bf16.mxu0 0
  %537 = vmatmul.mubr.bf16.gmra.mrb[0].mxu0 %v214
  %v538 = vpop.f32.mrb[0].mxu0
  %v539 = vadd.f32 %v82, %v538
  %v540 = vpop.f32.mrb[0].mxu0
  %v541 = vpop.f32.mrb[0].mxu0
  %v542 = vadd.f32 %v82, %v541
  %v543 = vpop.f32.mrb[0].mxu0
  %544 = vmatprep.mubr.bf16.mxu0 0
  %545 = vmatmul.mubr.bf16.gmra.mrb[0].mxu0 %v217
  %v546 = vpop.f32.mrb[0].mxu0
  %v547 = vadd.f32 %v82, %v546
  %v548 = vpop.f32.mrb[0].mxu0
  %v549 = vpop.f32.mrb[0].mxu0
  %v550 = vadd.f32 %v82, %v549
  %v551 = vpop.f32.mrb[0].mxu0
  %552 = vmatprep.mubr.bf16.mxu0 0
  %553 = vmatmul.mubr.bf16.gmra.mrb[0].mxu0 %v220
  %v554 = vpop.f32.mrb[0].mxu0
  %v555 = vadd.f32 %v82, %v554
  %v556 = vpop.f32.mrb[0].mxu0
  %v557 = vpop.f32.mrb[0].mxu0
  %v558 = vadd.f32 %v82, %v557
  %v559 = vpop.f32.mrb[0].mxu0
  %560 = vmatprep.mubr.bf16.mxu0 0
  %561 = vmatmul.mubr.bf16.gmra.mrb[0].mxu0 %v223
  %v562 = vpop.f32.mrb[0].mxu0
  %v563 = vadd.f32 %v82, %v562
  %v564 = vpop.f32.mrb[0].mxu0
  %v565 = vpop.f32.mrb[0].mxu0
  %v566 = vadd.f32 %v82, %v565
  %v567 = vpop.f32.mrb[0].mxu0
  %568 = vmatprep.mubr.bf16.mxu0 0
  %569 = vmatmul.mubr.bf16.gmra.mrb[0].mxu0 %v226
  %v570 = vpop.f32.mrb[0].mxu0
  %v571 = vadd.f32 %v82, %v570
  %v572 = vpop.f32.mrb[0].mxu0
  %v573 = vpop.f32.mrb[0].mxu0
  %v574 = vadd.f32 %v82, %v573
  %v575 = vpop.f32.mrb[0].mxu0
  %576 = vmatprep.mubr.bf16.mxu0 0
  %577 = vmatmul.mubr.bf16.gmra.mrb[0].mxu0 %v229
  %v578 = vpop.f32.mrb[0].mxu0
  %v579 = vadd.f32 %v82, %v578
  %v580 = vpop.f32.mrb[0].mxu0
  %v581 = vpop.f32.mrb[0].mxu0
  %v582 = vadd.f32 %v82, %v581
  %v583 = vpop.f32.mrb[0].mxu0
  %584 = vdwg.mxu0
  %v585 = vmax.f32 %v266, 0.0
  %v586 = vmax.f32 %v268, 0.0
  %v587 = vmax.f32 %v459, 0.0
  %v588 = vmax.f32 %v270, 0.0
  %v589 = vmax.f32 %v272, 0.0
  %v590 = vmax.f32 %v462, 0.0
  %v591 = vmax.f32 %v276, 0.0
  %v592 = vmax.f32 %v278, 0.0
  %v593 = vmax.f32 %v467, 0.0
  %v594 = vmax.f32 %v280, 0.0
  %v595 = vmax.f32 %v282, 0.0
  %v596 = vmax.f32 %v470, 0.0
  %v597 = vmax.f32 %v286, 0.0
  %v598 = vmax.f32 %v288, 0.0
  %v599 = vmax.f32 %v475, 0.0
  %v600 = vmax.f32 %v290, 0.0
  %v601 = vmax.f32 %v292, 0.0
  %v602 = vmax.f32 %v478, 0.0
  %v603 = vmax.f32 %v296, 0.0
  %v604 = vmax.f32 %v298, 0.0
  %v605 = vmax.f32 %v483, 0.0
  %v606 = vmax.f32 %v300, 0.0
  %v607 = vmax.f32 %v302, 0.0
  %v608 = vmax.f32 %v486, 0.0
  %v609 = vmax.f32 %v306, 0.0
  %v610 = vmax.f32 %v308, 0.0
  %v611 = vmax.f32 %v491, 0.0
  %v612 = vmax.f32 %v310, 0.0
  %v613 = vmax.f32 %v312, 0.0
  %v614 = vmax.f32 %v494, 0.0
  %v615 = vmax.f32 %v316, 0.0
  %v616 = vmax.f32 %v318, 0.0
  %v617 = vmax.f32 %v499, 0.0
  %v618 = vmax.f32 %v320, 0.0
  %v619 = vmax.f32 %v322, 0.0
  %v620 = vmax.f32 %v502, 0.0
  %v621 = vmax.f32 %v326, 0.0
  %v622 = vmax.f32 %v328, 0.0
  %v623 = vmax.f32 %v507, 0.0
  %v624 = vmax.f32 %v330, 0.0
  %v625 = vmax.f32 %v332, 0.0
  %v626 = vmax.f32 %v510, 0.0
  %v627 = vmax.f32 %v336, 0.0
  %v628 = vmax.f32 %v338, 0.0
  %v629 = vmax.f32 %v515, 0.0
  %v630 = vmax.f32 %v340, 0.0
  %v631 = vmax.f32 %v342, 0.0
  %v632 = vmax.f32 %v518, 0.0
  %v633 = vmax.f32 %v346, 0.0
  %v634 = vmax.f32 %v348, 0.0
  %v635 = vmax.f32 %v523, 0.0
  %v636 = vmax.f32 %v350, 0.0
  %v637 = vmax.f32 %v352, 0.0
  %v638 = vmax.f32 %v526, 0.0
  %v639 = vmax.f32 %v356, 0.0
  %v640 = vmax.f32 %v358, 0.0
  %v641 = vmax.f32 %v531, 0.0
  %v642 = vmax.f32 %v360, 0.0
  %v643 = vmax.f32 %v362, 0.0
  %v644 = vmax.f32 %v534, 0.0
  %v645 = vmax.f32 %v366, 0.0
  %v646 = vmax.f32 %v368, 0.0
  %v647 = vmax.f32 %v539, 0.0
  %v648 = vmax.f32 %v370, 0.0
  %v649 = vmax.f32 %v372, 0.0
  %v650 = vmax.f32 %v542, 0.0
  %v651 = vmax.f32 %v376, 0.0
  %v652 = vmax.f32 %v378, 0.0
  %v653 = vmax.f32 %v547, 0.0
  %v654 = vmax.f32 %v380, 0.0
  %v655 = vmax.f32 %v382, 0.0
  %v656 = vmax.f32 %v550, 0.0
  %v657 = vmax.f32 %v386, 0.0
  %v658 = vmax.f32 %v388, 0.0
  %v659 = vmax.f32 %v555, 0.0
  %v660 = vmax.f32 %v390, 0.0
  %v661 = vmax.f32 %v392, 0.0
  %v662 = vmax.f32 %v558, 0.0
  %v663 = vmax.f32 %v396, 0.0
  %v664 = vmax.f32 %v398, 0.0
  %v665 = vmax.f32 %v563, 0.0
  %v666 = vmax.f32 %v400, 0.0
  %v667 = vmax.f32 %v402, 0.0
  %v668 = vmax.f32 %v566, 0.0
  %v669 = vmax.f32 %v406, 0.0
  %v670 = vmax.f32 %v408, 0.0
  %v671 = vmax.f32 %v571, 0.0
  %v672 = vmax.f32 %v410, 0.0
  %v673 = vmax.f32 %v412, 0.0
  %v674 = vmax.f32 %v574, 0.0
  %v675 = vmax.f32 %v416, 0.0
  %v676 = vmax.f32 %v418, 0.0
  %v677 = vmax.f32 %v579, 0.0
  %v678 = vmax.f32 %v420, 0.0
  %v679 = vmax.f32 %v422, 0.0
  %v680 = vmax.f32 %v582, 0.0
  %v681 = vmin.f32 %v585, 1.0
  %v682 = vmin.f32 %v586, 1.0
  %v683 = vmin.f32 %v587, 1.0
  %v684 = vmin.f32 %v588, 1.0
  %v685 = vmin.f32 %v589, 1.0
  %v686 = vmin.f32 %v590, 1.0
  %v687 = vmin.f32 %v591, 1.0
  %v688 = vmin.f32 %v592, 1.0
  %v689 = vmin.f32 %v593, 1.0
  %v690 = vmin.f32 %v594, 1.0
  %v691 = vmin.f32 %v595, 1.0
  %v692 = vmin.f32 %v596, 1.0
  %v693 = vmin.f32 %v597, 1.0
  %v694 = vmin.f32 %v598, 1.0
  %v695 = vmin.f32 %v599, 1.0
  %v696 = vmin.f32 %v600, 1.0
  %v697 = vmin.f32 %v601, 1.0
  %v698 = vmin.f32 %v602, 1.0
  %v699 = vmin.f32 %v603, 1.0
  %v700 = vmin.f32 %v604, 1.0
  %v701 = vmin.f32 %v605, 1.0
  %v702 = vmin.f32 %v606, 1.0
  %v703 = vmin.f32 %v607, 1.0
  %v704 = vmin.f32 %v608, 1.0
  %v705 = vmin.f32 %v609, 1.0
  %v706 = vmin.f32 %v610, 1.0
  %v707 = vmin.f32 %v611, 1.0
  %v708 = vmin.f32 %v612, 1.0
  %v709 = vmin.f32 %v613, 1.0
  %v710 = vmin.f32 %v614, 1.0
  %v711 = vmin.f32 %v615, 1.0
  %v712 = vmin.f32 %v616, 1.0
  %v713 = vmin.f32 %v617, 1.0
  %v714 = vmin.f32 %v618, 1.0
  %v715 = vmin.f32 %v619, 1.0
  %v716 = vmin.f32 %v620, 1.0
  %v717 = vmin.f32 %v621, 1.0
  %v718 = vmin.f32 %v622, 1.0
  %v719 = vmin.f32 %v623, 1.0
  %v720 = vmin.f32 %v624, 1.0
  %v721 = vmin.f32 %v625, 1.0
  %v722 = vmin.f32 %v626, 1.0
  %v723 = vmin.f32 %v627, 1.0
  %v724 = vmin.f32 %v628, 1.0
  %v725 = vmin.f32 %v629, 1.0
  %v726 = vmin.f32 %v630, 1.0
  %v727 = vmin.f32 %v631, 1.0
  %v728 = vmin.f32 %v632, 1.0
  %v729 = vmin.f32 %v633, 1.0
  %v730 = vmin.f32 %v634, 1.0
  %v731 = vmin.f32 %v635, 1.0
  %v732 = vmin.f32 %v636, 1.0
  %v733 = vmin.f32 %v637, 1.0
  %v734 = vmin.f32 %v638, 1.0
  %v735 = vmin.f32 %v639, 1.0
  %v736 = vmin.f32 %v640, 1.0
  %v737 = vmin.f32 %v641, 1.0
  %v738 = vmin.f32 %v642, 1.0
  %v739 = vmin.f32 %v643, 1.0
  %v740 = vmin.f32 %v644, 1.0
  %v741 = vmin.f32 %v645, 1.0
  %v742 = vmin.f32 %v646, 1.0
  %v743 = vmin.f32 %v647, 1.0
  %v744 = vmin.f32 %v648, 1.0
  %v745 = vmin.f32 %v649, 1.0
  %v746 = vmin.f32 %v650, 1.0
  %v747 = vmin.f32 %v651, 1.0
  %v748 = vmin.f32 %v652, 1.0
  %v749 = vmin.f32 %v653, 1.0
  %v750 = vmin.f32 %v654, 1.0
  %v751 = vmin.f32 %v655, 1.0
  %v752 = vmin.f32 %v656, 1.0
  %v753 = vmin.f32 %v657, 1.0
  %v754 = vmin.f32 %v658, 1.0
  %v755 = vmin.f32 %v659, 1.0
  %v756 = vmin.f32 %v660, 1.0
  %v757 = vmin.f32 %v661, 1.0
  %v758 = vmin.f32 %v662, 1.0
  %v759 = vmin.f32 %v663, 1.0
  %v760 = vmin.f32 %v664, 1.0
  %v761 = vmin.f32 %v665, 1.0
  %v762 = vmin.f32 %v666, 1.0
  %v763 = vmin.f32 %v667, 1.0
  %v764 = vmin.f32 %v668, 1.0
  %v765 = vmin.f32 %v669, 1.0
  %v766 = vmin.f32 %v670, 1.0
  %v767 = vmin.f32 %v671, 1.0
  %v768 = vmin.f32 %v672, 1.0
  %v769 = vmin.f32 %v673, 1.0
  %v770 = vmin.f32 %v674, 1.0
  %v771 = vmin.f32 %v675, 1.0
  %v772 = vmin.f32 %v676, 1.0
  %v773 = vmin.f32 %v677, 1.0
  %v774 = vmin.f32 %v678, 1.0
  %v775 = vmin.f32 %v679, 1.0
  %v776 = vmin.f32 %v680, 1.0
  %v777 = vmul.f32 %v681, %v682
  %v778 = vmul.f32 %v684, %v685
  %v779 = vmul.f32 %v687, %v688
  %v780 = vmul.f32 %v690, %v691
  %v781 = vmul.f32 %v693, %v694
  %v782 = vmul.f32 %v696, %v697
  %v783 = vmul.f32 %v699, %v700
  %v784 = vmul.f32 %v702, %v703
  %v785 = vmul.f32 %v705, %v706
  %v786 = vmul.f32 %v708, %v709
  %v787 = vmul.f32 %v711, %v712
  %v788 = vmul.f32 %v714, %v715
  %v789 = vmul.f32 %v717, %v718
  %v790 = vmul.f32 %v720, %v721
  %v791 = vmul.f32 %v723, %v724
  %v792 = vmul.f32 %v726, %v727
  %v793 = vmul.f32 %v729, %v730
  %v794 = vmul.f32 %v732, %v733
  %v795 = vmul.f32 %v735, %v736
  %v796 = vmul.f32 %v738, %v739
  %v797 = vmul.f32 %v741, %v742
  %v798 = vmul.f32 %v744, %v745
  %v799 = vmul.f32 %v747, %v748
  %v800 = vmul.f32 %v750, %v751
  %v801 = vmul.f32 %v753, %v754
  %v802 = vmul.f32 %v756, %v757
  %v803 = vmul.f32 %v759, %v760
  %v804 = vmul.f32 %v762, %v763
  %v805 = vmul.f32 %v765, %v766
  %v806 = vmul.f32 %v768, %v769
  %v807 = vmul.f32 %v771, %v772
  %v808 = vmul.f32 %v774, %v775
  %v809 = vmul.f32 %v777, %v683
  %v810 = vmul.f32 %v778, %v686
  %v811 = vmul.f32 %v779, %v689
  %v812 = vmul.f32 %v780, %v692
  %v813 = vmul.f32 %v781, %v695
  %v814 = vmul.f32 %v782, %v698
  %v815 = vmul.f32 %v783, %v701
  %v816 = vmul.f32 %v784, %v704
  %v817 = vmul.f32 %v785, %v707
  %v818 = vmul.f32 %v786, %v710
  %v819 = vmul.f32 %v787, %v713
  %v820 = vmul.f32 %v788, %v716
  %v821 = vmul.f32 %v789, %v719
  %v822 = vmul.f32 %v790, %v722
  %v823 = vmul.f32 %v791, %v725
  %v824 = vmul.f32 %v792, %v728
  %v825 = vmul.f32 %v793, %v731
  %v826 = vmul.f32 %v794, %v734
  %v827 = vmul.f32 %v795, %v737
  %v828 = vmul.f32 %v796, %v740
  %v829 = vmul.f32 %v797, %v743
  %v830 = vmul.f32 %v798, %v746
  %v831 = vmul.f32 %v799, %v749
  %v832 = vmul.f32 %v800, %v752
  %v833 = vmul.f32 %v801, %v755
  %v834 = vmul.f32 %v802, %v758
  %v835 = vmul.f32 %v803, %v761
  %v836 = vmul.f32 %v804, %v764
  %v837 = vmul.f32 %v805, %v767
  %v838 = vmul.f32 %v806, %v770
  %v839 = vmul.f32 %v807, %v773
  %v840 = vmul.f32 %v808, %v776
  %v841 = vpack.c.bf16 %v810, %v809
  %v842 = vpack.c.bf16 %v812, %v811
  %v843 = vpack.c.bf16 %v814, %v813
  %v844 = vpack.c.bf16 %v816, %v815
  %v845 = vpack.c.bf16 %v818, %v817
  %v846 = vpack.c.bf16 %v820, %v819
  %v847 = vpack.c.bf16 %v822, %v821
  %v848 = vpack.c.bf16 %v824, %v823
  %v849 = vpack.c.bf16 %v826, %v825
  %v850 = vpack.c.bf16 %v828, %v827
  %v851 = vpack.c.bf16 %v830, %v829
  %v852 = vpack.c.bf16 %v832, %v831
  %v853 = vpack.c.bf16 %v834, %v833
  %v854 = vpack.c.bf16 %v836, %v835
  %v855 = vpack.c.bf16 %v838, %v837
  %v856 = vpack.c.bf16 %v840, %v839
  %v857 = vld [vmem:[%s4] sm:$0xf]
  %v858 = vld [vmem:[%s4 + $0x4] sm:$0xf]
  %v859 = vld [vmem:[%s4 + $0x8] sm:$0xf]
  %v860 = vld [vmem:[%s4 + $0xc] sm:$0xf]
  %v861 = vld [vmem:[%s4 + $0x10] sm:$0xf]
  %v862 = vld [vmem:[%s4 + $0x14] sm:$0xf]
  %v863 = vld [vmem:[%s4 + $0x18] sm:$0xf]
  %v864 = vld [vmem:[%s4 + $0x1c] sm:$0xf]
  %v865 = vld [vmem:[%s4 + $0x20] sm:$0xf]
  %v866 = vld [vmem:[%s4 + $0x24] sm:$0xf]
  %v867 = vld [vmem:[%s4 + $0x28] sm:$0xf]
  %v868 = vld [vmem:[%s4 + $0x2c] sm:$0xf]
  %v869 = vld [vmem:[%s4 + $0x30] sm:$0xf]
  %v870 = vld [vmem:[%s4 + $0x34] sm:$0xf]
  %v871 = vld [vmem:[%s4 + $0x38] sm:$0xf]
  %v872 = vld [vmem:[%s4 + $0x3c] sm:$0xf]
  %v889 = vunpack.c.l.b16 %v857
  %v890 = vunpack.c.l.b16 %v858
  %v891 = vunpack.c.l.b16 %v859
  %v892 = vunpack.c.l.b16 %v860
  %v893 = vunpack.c.l.b16 %v861
  %v894 = vunpack.c.l.b16 %v862
  %v895 = vunpack.c.l.b16 %v863
  %v896 = vunpack.c.l.b16 %v864
  %v897 = vunpack.c.l.b16 %v865
  %v898 = vunpack.c.l.b16 %v866
  %v899 = vunpack.c.l.b16 %v867
  %v900 = vunpack.c.l.b16 %v868
  %v901 = vunpack.c.l.b16 %v869
  %v902 = vunpack.c.l.b16 %v870
  %v903 = vunpack.c.l.b16 %v871
  %v904 = vunpack.c.l.b16 %v872
  %v905 = vpack.c.b16 %v890, %v889
  %v906 = vpack.c.b16 %v892, %v891
  %v907 = vpack.c.b16 %v894, %v893
  %v908 = vpack.c.b16 %v896, %v895
  %v909 = vpack.c.b16 %v898, %v897
  %v910 = vpack.c.b16 %v900, %v899
  %v911 = vpack.c.b16 %v902, %v901
  %v912 = vpack.c.b16 %v904, %v903
  %921 = vmatprep.subr.bf16.mxu0 0
  %922 = vmatpush1.bf16.msra.mxu0 %v905
  %923 = vmatprep.subr.bf16.mxu0 0
  %924 = vmatpush1.bf16.msra.mxu0 %v906
  %925 = vmatprep.subr.bf16.mxu0 0
  %926 = vmatpush1.bf16.msra.mxu0 %v907
  %927 = vmatprep.subr.bf16.mxu0 0
  %928 = vmatpush1.bf16.msra.mxu0 %v908
  %929 = vmatprep.subr.bf16.mxu0 0
  %930 = vmatpush1.bf16.msra.mxu0 %v909
  %931 = vmatprep.subr.bf16.mxu0 0
  %932 = vmatpush1.bf16.msra.mxu0 %v910
  %933 = vmatprep.subr.bf16.mxu0 0
  %934 = vmatpush1.bf16.msra.mxu0 %v911
  %935 = vmatprep.subr.bf16.mxu0 0
  %936 = vmatpush1.bf16.msra.mxu0 %v912
  %937 = vmatprep.subr.bf16.mxu0 0
  %938 = vmatpush1.bf16.msra.mxu0 0
  %939 = vmatprep.subr.bf16.mxu0 0
  %940 = vmatpush1.bf16.msra.mxu0 0
  %941 = vmatprep.subr.bf16.mxu0 0
  %942 = vmatpush1.bf16.msra.mxu0 0
  %943 = vmatprep.subr.bf16.mxu0 0
  %944 = vmatpush1.bf16.msra.mxu0 0
  %945 = vmatprep.subr.bf16.mxu0 0
  %946 = vmatpush1.bf16.msra.mxu0 0
  %947 = vmatprep.subr.bf16.mxu0 0
  %948 = vmatpush1.bf16.msra.mxu0 0
  %949 = vmatprep.subr.bf16.mxu0 0
  %950 = vmatpush1.bf16.msra.mxu0 0
  %951 = vmatprep.subr.bf16.mxu0 0
  %952 = vmatpush1.bf16.msra.mxu0 0
  %953 = vmatprep.mubr.bf16.mxu0 0
  %954 = vmatmul.mubr.bf16.gmra.mrb[0].mxu0 %v841
  %v955 = vpop.f32.mrb[0].mxu0
  %v956 = vadd.f32 0.0, %v955
  %v957 = vpop.f32.mrb[0].mxu0
  %v958 = vpop.f32.mrb[0].mxu0
  %v959 = vadd.f32 0.0, %v958
  %v960 = vpop.f32.mrb[0].mxu0
  %961 = vmatprep.mubr.bf16.mxu0 0
  %962 = vmatmul.mubr.bf16.gmra.mrb[0].mxu0 %v842
  %v963 = vpop.f32.mrb[0].mxu0
  %v964 = vadd.f32 0.0, %v963
  %v965 = vpop.f32.mrb[0].mxu0
  %v966 = vpop.f32.mrb[0].mxu0
  %v967 = vadd.f32 0.0, %v966
  %v968 = vpop.f32.mrb[0].mxu0
  %969 = vmatprep.mubr.bf16.mxu0 0
  %970 = vmatmul.mubr.bf16.gmra.mrb[0].mxu0 %v843
  %v971 = vpop.f32.mrb[0].mxu0
  %v972 = vadd.f32 0.0, %v971
  %v973 = vpop.f32.mrb[0].mxu0
  %v974 = vpop.f32.mrb[0].mxu0
  %v975 = vadd.f32 0.0, %v974
  %v976 = vpop.f32.mrb[0].mxu0
  %977 = vmatprep.mubr.bf16.mxu0 0
  %978 = vmatmul.mubr.bf16.gmra.mrb[0].mxu0 %v844
  %v979 = vpop.f32.mrb[0].mxu0
  %v980 = vadd.f32 0.0, %v979
  %v981 = vpop.f32.mrb[0].mxu0
  %v982 = vpop.f32.mrb[0].mxu0
  %v983 = vadd.f32 0.0, %v982
  %v984 = vpop.f32.mrb[0].mxu0
  %985 = vmatprep.mubr.bf16.mxu0 0
  %986 = vmatmul.mubr.bf16.gmra.mrb[0].mxu0 %v845
  %v987 = vpop.f32.mrb[0].mxu0
  %v988 = vadd.f32 0.0, %v987
  %v989 = vpop.f32.mrb[0].mxu0
  %v990 = vpop.f32.mrb[0].mxu0
  %v991 = vadd.f32 0.0, %v990
  %v992 = vpop.f32.mrb[0].mxu0
  %993 = vmatprep.mubr.bf16.mxu0 0
  %994 = vmatmul.mubr.bf16.gmra.mrb[0].mxu0 %v846
  %v995 = vpop.f32.mrb[0].mxu0
  %v996 = vadd.f32 0.0, %v995
  %v997 = vpop.f32.mrb[0].mxu0
  %v998 = vpop.f32.mrb[0].mxu0
  %v999 = vadd.f32 0.0, %v998
  %v1000 = vpop.f32.mrb[0].mxu0
  %1001 = vmatprep.mubr.bf16.mxu0 0
  %1002 = vmatmul.mubr.bf16.gmra.mrb[0].mxu0 %v847
  %v1003 = vpop.f32.mrb[0].mxu0
  %v1004 = vadd.f32 0.0, %v1003
  %v1005 = vpop.f32.mrb[0].mxu0
  %v1006 = vpop.f32.mrb[0].mxu0
  %v1007 = vadd.f32 0.0, %v1006
  %v1008 = vpop.f32.mrb[0].mxu0
  %1009 = vmatprep.mubr.bf16.mxu0 0
  %1010 = vmatmul.mubr.bf16.gmra.mrb[0].mxu0 %v848
  %v1011 = vpop.f32.mrb[0].mxu0
  %v1012 = vadd.f32 0.0, %v1011
  %v1013 = vpop.f32.mrb[0].mxu0
  %v1014 = vpop.f32.mrb[0].mxu0
  %v1015 = vadd.f32 0.0, %v1014
  %v1016 = vpop.f32.mrb[0].mxu0
  %1017 = vmatprep.mubr.bf16.mxu0 0
  %1018 = vmatmul.mubr.bf16.gmra.mrb[0].mxu0 %v849
  %v1019 = vpop.f32.mrb[0].mxu0
  %v1020 = vadd.f32 0.0, %v1019
  %v1021 = vpop.f32.mrb[0].mxu0
  %v1022 = vpop.f32.mrb[0].mxu0
  %v1023 = vadd.f32 0.0, %v1022
  %v1024 = vpop.f32.mrb[0].mxu0
  %1025 = vmatprep.mubr.bf16.mxu0 0
  %1026 = vmatmul.mubr.bf16.gmra.mrb[0].mxu0 %v850
  %v1027 = vpop.f32.mrb[0].mxu0
  %v1028 = vadd.f32 0.0, %v1027
  %v1029 = vpop.f32.mrb[0].mxu0
  %v1030 = vpop.f32.mrb[0].mxu0
  %v1031 = vadd.f32 0.0, %v1030
  %v1032 = vpop.f32.mrb[0].mxu0
  %1033 = vmatprep.mubr.bf16.mxu0 0
  %1034 = vmatmul.mubr.bf16.gmra.mrb[0].mxu0 %v851
  %v1035 = vpop.f32.mrb[0].mxu0
  %v1036 = vadd.f32 0.0, %v1035
  %v1037 = vpop.f32.mrb[0].mxu0
  %v1038 = vpop.f32.mrb[0].mxu0
  %v1039 = vadd.f32 0.0, %v1038
  %v1040 = vpop.f32.mrb[0].mxu0
  %1041 = vmatprep.mubr.bf16.mxu0 0
  %1042 = vmatmul.mubr.bf16.gmra.mrb[0].mxu0 %v852
  %v1043 = vpop.f32.mrb[0].mxu0
  %v1044 = vadd.f32 0.0, %v1043
  %v1045 = vpop.f32.mrb[0].mxu0
  %v1046 = vpop.f32.mrb[0].mxu0
  %v1047 = vadd.f32 0.0, %v1046
  %v1048 = vpop.f32.mrb[0].mxu0
  %1049 = vmatprep.mubr.bf16.mxu0 0
  %1050 = vmatmul.mubr.bf16.gmra.mrb[0].mxu0 %v853
  %v1051 = vpop.f32.mrb[0].mxu0
  %v1052 = vadd.f32 0.0, %v1051
  %v1053 = vpop.f32.mrb[0].mxu0
  %v1054 = vpop.f32.mrb[0].mxu0
  %v1055 = vadd.f32 0.0, %v1054
  %v1056 = vpop.f32.mrb[0].mxu0
  %1057 = vmatprep.mubr.bf16.mxu0 0
  %1058 = vmatmul.mubr.bf16.gmra.mrb[0].mxu0 %v854
  %v1059 = vpop.f32.mrb[0].mxu0
  %v1060 = vadd.f32 0.0, %v1059
  %v1061 = vpop.f32.mrb[0].mxu0
  %v1062 = vpop.f32.mrb[0].mxu0
  %v1063 = vadd.f32 0.0, %v1062
  %v1064 = vpop.f32.mrb[0].mxu0
  %1065 = vmatprep.mubr.bf16.mxu0 0
  %1066 = vmatmul.mubr.bf16.gmra.mrb[0].mxu0 %v855
  %v1067 = vpop.f32.mrb[0].mxu0
  %v1068 = vadd.f32 0.0, %v1067
  %v1069 = vpop.f32.mrb[0].mxu0
  %v1070 = vpop.f32.mrb[0].mxu0
  %v1071 = vadd.f32 0.0, %v1070
  %v1072 = vpop.f32.mrb[0].mxu0
  %1073 = vmatprep.mubr.bf16.mxu0 0
  %1074 = vmatmul.mubr.bf16.gmra.mrb[0].mxu0 %v856
  %v1075 = vpop.f32.mrb[0].mxu0
  %v1076 = vadd.f32 0.0, %v1075
  %v1077 = vpop.f32.mrb[0].mxu0
  %v1078 = vpop.f32.mrb[0].mxu0
  %v1079 = vadd.f32 0.0, %v1078
  %v1080 = vpop.f32.mrb[0].mxu0
  %1081 = vdwg.mxu0
  %v1082 = vpack.c.bf16 %v959, %v956
  %v1083 = vpack.c.bf16 %v967, %v964
  %v1084 = vpack.c.bf16 %v975, %v972
  %v1085 = vpack.c.bf16 %v983, %v980
  %v1086 = vpack.c.bf16 %v991, %v988
  %v1087 = vpack.c.bf16 %v999, %v996
  %v1088 = vpack.c.bf16 %v1007, %v1004
  %v1089 = vpack.c.bf16 %v1015, %v1012
  %v1090 = vpack.c.bf16 %v1023, %v1020
  %v1091 = vpack.c.bf16 %v1031, %v1028
  %v1092 = vpack.c.bf16 %v1039, %v1036
  %v1093 = vpack.c.bf16 %v1047, %v1044
  %v1094 = vpack.c.bf16 %v1055, %v1052
  %v1095 = vpack.c.bf16 %v1063, %v1060
  %v1096 = vpack.c.bf16 %v1071, %v1068
  %v1097 = vpack.c.bf16 %v1079, %v1076
  %v1098 = vld [vmem:[%s5] sm:$0xff]
  %v1099 = vld [vmem:[%s5 + $0x8] sm:$0xf]
  %v1100 = vld [vmem:[%s5 + $0xc] sm:$0xff]
  %v1101 = vld [vmem:[%s5 + $0x14] sm:$0xf]
  %v1102 = vld [vmem:[%s6] sm:$0xff]
  %v1103 = vld [vmem:[%s6 + $0x8] sm:$0xf]
  %v1104 = vld [vmem:[%s6 + $0xc] sm:$0xff]
  %v1105 = vld [vmem:[%s6 + $0x14] sm:$0xf]
  %v1110 = vunpack.c.l.b16 %v1102
  %v1111 = vunpack.c.h.b16 %v1102
  %v1112 = vunpack.c.l.b16 %v1103
  %v1113 = vunpack.c.l.b16 %v1104
  %v1114 = vunpack.c.h.b16 %v1104
  %v1115 = vunpack.c.l.b16 %v1105
  %v1116 = vpack.c.b16 %v1113, %v1110
  %v1117 = vpack.c.b16 %v1114, %v1111
  %v1118 = vpack.c.b16 %v1115, %v1112
  %v1123 = vsel %vm182, %v1082, 0
  %v1126 = vsel %vm182, %v1083, 0
  %v1129 = vsel %vm182, %v1084, 0
  %v1132 = vsel %vm182, %v1085, 0
  %v1135 = vsel %vm182, %v1086, 0
  %v1138 = vsel %vm182, %v1087, 0
  %v1141 = vsel %vm182, %v1088, 0
  %v1144 = vsel %vm182, %v1089, 0
  %v1147 = vsel %vm182, %v1090, 0
  %v1150 = vsel %vm182, %v1091, 0
  %v1153 = vsel %vm182, %v1092, 0
  %v1156 = vsel %vm182, %v1093, 0
  %v1159 = vsel %vm182, %v1094, 0
  %v1162 = vsel %vm182, %v1095, 0
  %v1165 = vsel %vm182, %v1096, 0
  %v1168 = vsel %vm182, %v1097, 0
  %1170 = vmatprep.subr.bf16.mxu0 %v1117
  %1171 = vmatpush1.bf16.msra.mxu0 %v1116
  %1172 = vmatprep.subr.bf16.mxu0 0
  %1173 = vmatpush1.bf16.msra.mxu0 0
  %1174 = vmatprep.subr.bf16.mxu0 0
  %1175 = vmatpush1.bf16.msra.mxu0 0
  %1176 = vmatprep.subr.bf16.mxu0 0
  %1177 = vmatpush1.bf16.msra.mxu0 0
  %1178 = vmatprep.subr.bf16.mxu0 0
  %1179 = vmatpush1.bf16.msra.mxu0 0
  %1180 = vmatprep.subr.bf16.mxu0 0
  %1181 = vmatpush1.bf16.msra.mxu0 0
  %1182 = vmatprep.subr.bf16.mxu0 0
  %1183 = vmatpush1.bf16.msra.mxu0 0
  %1184 = vmatprep.subr.bf16.mxu0 0
  %1185 = vmatpush1.bf16.msra.mxu0 0
  %1186 = vmatprep.subr.bf16.mxu0 0
  %1187 = vmatpush1.bf16.msra.mxu0 0
  %1188 = vmatprep.subr.bf16.mxu0 0
  %1189 = vmatpush1.bf16.msra.mxu0 0
  %1190 = vmatprep.subr.bf16.mxu0 0
  %1191 = vmatpush1.bf16.msra.mxu0 0
  %1192 = vmatprep.subr.bf16.mxu0 0
  %1193 = vmatpush1.bf16.msra.mxu0 0
  %1194 = vmatprep.subr.bf16.mxu0 0
  %1195 = vmatpush1.bf16.msra.mxu0 0
  %1196 = vmatprep.subr.bf16.mxu0 0
  %1197 = vmatpush1.bf16.msra.mxu0 0
  %1198 = vmatprep.subr.bf16.mxu0 0
  %1199 = vmatpush1.bf16.msra.mxu0 0
  %1200 = vmatprep.subr.bf16.mxu0 0
  %1201 = vmatpush1.bf16.msra.mxu0 0
  %1202 = vmatprep.mubr.bf16.mxu0 0
  %1203 = vmatmul.mubr.bf16.gmra.mrb[0].mxu0 %v1123
  %v1204 = vpop.f32.mrb[0].mxu0
  %v1205 = vadd.f32 0.0, %v1204
  %v1206 = vpop.f32.mrb[0].mxu0
  %v1207 = vadd.f32 0.0, %v1206
  %v1208 = vpop.f32.mrb[0].mxu0
  %v1209 = vadd.f32 0.0, %v1208
  %v1210 = vpop.f32.mrb[0].mxu0
  %v1211 = vadd.f32 0.0, %v1210
  %1212 = vmatprep.mubr.bf16.mxu0 0
  %1213 = vmatmul.mubr.bf16.gmra.mrb[0].mxu0 %v1126
  %v1214 = vpop.f32.mrb[0].mxu0
  %v1215 = vadd.f32 0.0, %v1214
  %v1216 = vpop.f32.mrb[0].mxu0
  %v1217 = vadd.f32 0.0, %v1216
  %v1218 = vpop.f32.mrb[0].mxu0
  %v1219 = vadd.f32 0.0, %v1218
  %v1220 = vpop.f32.mrb[0].mxu0
  %v1221 = vadd.f32 0.0, %v1220
  %1222 = vmatprep.mubr.bf16.mxu0 0
  %1223 = vmatmul.mubr.bf16.gmra.mrb[0].mxu0 %v1129
  %v1224 = vpop.f32.mrb[0].mxu0
  %v1225 = vadd.f32 0.0, %v1224
  %v1226 = vpop.f32.mrb[0].mxu0
  %v1227 = vadd.f32 0.0, %v1226
  %v1228 = vpop.f32.mrb[0].mxu0
  %v1229 = vadd.f32 0.0, %v1228
  %v1230 = vpop.f32.mrb[0].mxu0
  %v1231 = vadd.f32 0.0, %v1230
  %1232 = vmatprep.mubr.bf16.mxu0 0
  %1233 = vmatmul.mubr.bf16.gmra.mrb[0].mxu0 %v1132
  %v1234 = vpop.f32.mrb[0].mxu0
  %v1235 = vadd.f32 0.0, %v1234
  %v1236 = vpop.f32.mrb[0].mxu0
  %v1237 = vadd.f32 0.0, %v1236
  %v1238 = vpop.f32.mrb[0].mxu0
  %v1239 = vadd.f32 0.0, %v1238
  %v1240 = vpop.f32.mrb[0].mxu0
  %v1241 = vadd.f32 0.0, %v1240
  %1242 = vmatprep.mubr.bf16.mxu0 0
  %1243 = vmatmul.mubr.bf16.gmra.mrb[0].mxu0 %v1135
  %v1244 = vpop.f32.mrb[0].mxu0
  %v1245 = vadd.f32 0.0, %v1244
  %v1246 = vpop.f32.mrb[0].mxu0
  %v1247 = vadd.f32 0.0, %v1246
  %v1248 = vpop.f32.mrb[0].mxu0
  %v1249 = vadd.f32 0.0, %v1248
  %v1250 = vpop.f32.mrb[0].mxu0
  %v1251 = vadd.f32 0.0, %v1250
  %1252 = vmatprep.mubr.bf16.mxu0 0
  %1253 = vmatmul.mubr.bf16.gmra.mrb[0].mxu0 %v1138
  %v1254 = vpop.f32.mrb[0].mxu0
  %v1255 = vadd.f32 0.0, %v1254
  %v1256 = vpop.f32.mrb[0].mxu0
  %v1257 = vadd.f32 0.0, %v1256
  %v1258 = vpop.f32.mrb[0].mxu0
  %v1259 = vadd.f32 0.0, %v1258
  %v1260 = vpop.f32.mrb[0].mxu0
  %v1261 = vadd.f32 0.0, %v1260
  %1262 = vmatprep.mubr.bf16.mxu0 0
  %1263 = vmatmul.mubr.bf16.gmra.mrb[0].mxu0 %v1141
  %v1264 = vpop.f32.mrb[0].mxu0
  %v1265 = vadd.f32 0.0, %v1264
  %v1266 = vpop.f32.mrb[0].mxu0
  %v1267 = vadd.f32 0.0, %v1266
  %v1268 = vpop.f32.mrb[0].mxu0
  %v1269 = vadd.f32 0.0, %v1268
  %v1270 = vpop.f32.mrb[0].mxu0
  %v1271 = vadd.f32 0.0, %v1270
  %1272 = vmatprep.mubr.bf16.mxu0 0
  %1273 = vmatmul.mubr.bf16.gmra.mrb[0].mxu0 %v1144
  %v1274 = vpop.f32.mrb[0].mxu0
  %v1275 = vadd.f32 0.0, %v1274
  %v1276 = vpop.f32.mrb[0].mxu0
  %v1277 = vadd.f32 0.0, %v1276
  %v1278 = vpop.f32.mrb[0].mxu0
  %v1279 = vadd.f32 0.0, %v1278
  %v1280 = vpop.f32.mrb[0].mxu0
  %v1281 = vadd.f32 0.0, %v1280
  %1282 = vmatprep.mubr.bf16.mxu0 0
  %1283 = vmatmul.mubr.bf16.gmra.mrb[0].mxu0 %v1147
  %v1284 = vpop.f32.mrb[0].mxu0
  %v1285 = vadd.f32 0.0, %v1284
  %v1286 = vpop.f32.mrb[0].mxu0
  %v1287 = vadd.f32 0.0, %v1286
  %v1288 = vpop.f32.mrb[0].mxu0
  %v1289 = vadd.f32 0.0, %v1288
  %v1290 = vpop.f32.mrb[0].mxu0
  %v1291 = vadd.f32 0.0, %v1290
  %1292 = vmatprep.mubr.bf16.mxu0 0
  %1293 = vmatmul.mubr.bf16.gmra.mrb[0].mxu0 %v1150
  %v1294 = vpop.f32.mrb[0].mxu0
  %v1295 = vadd.f32 0.0, %v1294
  %v1296 = vpop.f32.mrb[0].mxu0
  %v1297 = vadd.f32 0.0, %v1296
  %v1298 = vpop.f32.mrb[0].mxu0
  %v1299 = vadd.f32 0.0, %v1298
  %v1300 = vpop.f32.mrb[0].mxu0
  %v1301 = vadd.f32 0.0, %v1300
  %1302 = vmatprep.mubr.bf16.mxu0 0
  %1303 = vmatmul.mubr.bf16.gmra.mrb[0].mxu0 %v1153
  %v1304 = vpop.f32.mrb[0].mxu0
  %v1305 = vadd.f32 0.0, %v1304
  %v1306 = vpop.f32.mrb[0].mxu0
  %v1307 = vadd.f32 0.0, %v1306
  %v1308 = vpop.f32.mrb[0].mxu0
  %v1309 = vadd.f32 0.0, %v1308
  %v1310 = vpop.f32.mrb[0].mxu0
  %v1311 = vadd.f32 0.0, %v1310
  %1312 = vmatprep.mubr.bf16.mxu0 0
  %1313 = vmatmul.mubr.bf16.gmra.mrb[0].mxu0 %v1156
  %v1314 = vpop.f32.mrb[0].mxu0
  %v1315 = vadd.f32 0.0, %v1314
  %v1316 = vpop.f32.mrb[0].mxu0
  %v1317 = vadd.f32 0.0, %v1316
  %v1318 = vpop.f32.mrb[0].mxu0
  %v1319 = vadd.f32 0.0, %v1318
  %v1320 = vpop.f32.mrb[0].mxu0
  %v1321 = vadd.f32 0.0, %v1320
  %1322 = vmatprep.mubr.bf16.mxu0 0
  %1323 = vmatmul.mubr.bf16.gmra.mrb[0].mxu0 %v1159
  %v1324 = vpop.f32.mrb[0].mxu0
  %v1325 = vadd.f32 0.0, %v1324
  %v1326 = vpop.f32.mrb[0].mxu0
  %v1327 = vadd.f32 0.0, %v1326
  %v1328 = vpop.f32.mrb[0].mxu0
  %v1329 = vadd.f32 0.0, %v1328
  %v1330 = vpop.f32.mrb[0].mxu0
  %v1331 = vadd.f32 0.0, %v1330
  %1332 = vmatprep.mubr.bf16.mxu0 0
  %1333 = vmatmul.mubr.bf16.gmra.mrb[0].mxu0 %v1162
  %v1334 = vpop.f32.mrb[0].mxu0
  %v1335 = vadd.f32 0.0, %v1334
  %v1336 = vpop.f32.mrb[0].mxu0
  %v1337 = vadd.f32 0.0, %v1336
  %v1338 = vpop.f32.mrb[0].mxu0
  %v1339 = vadd.f32 0.0, %v1338
  %v1340 = vpop.f32.mrb[0].mxu0
  %v1341 = vadd.f32 0.0, %v1340
  %1342 = vmatprep.mubr.bf16.mxu0 0
  %1343 = vmatmul.mubr.bf16.gmra.mrb[0].mxu0 %v1165
  %v1344 = vpop.f32.mrb[0].mxu0
  %v1345 = vadd.f32 0.0, %v1344
  %v1346 = vpop.f32.mrb[0].mxu0
  %v1347 = vadd.f32 0.0, %v1346
  %v1348 = vpop.f32.mrb[0].mxu0
  %v1349 = vadd.f32 0.0, %v1348
  %v1350 = vpop.f32.mrb[0].mxu0
  %v1351 = vadd.f32 0.0, %v1350
  %1352 = vmatprep.mubr.bf16.mxu0 0
  %1353 = vmatmul.mubr.bf16.gmra.mrb[0].mxu0 %v1168
  %v1354 = vpop.f32.mrb[0].mxu0
  %v1355 = vadd.f32 0.0, %v1354
  %v1356 = vpop.f32.mrb[0].mxu0
  %v1357 = vadd.f32 0.0, %v1356
  %v1358 = vpop.f32.mrb[0].mxu0
  %v1359 = vadd.f32 0.0, %v1358
  %v1360 = vpop.f32.mrb[0].mxu0
  %v1361 = vadd.f32 0.0, %v1360
  %1362 = vdwg.mxu0
  %1363 = vmatprep.subr.bf16.mxu0 0
  %1364 = vmatpush1.bf16.msra.mxu0 %v1118
  %1365 = vmatprep.subr.bf16.mxu0 0
  %1366 = vmatpush1.bf16.msra.mxu0 0
  %1367 = vmatprep.subr.bf16.mxu0 0
  %1368 = vmatpush1.bf16.msra.mxu0 0
  %1369 = vmatprep.subr.bf16.mxu0 0
  %1370 = vmatpush1.bf16.msra.mxu0 0
  %1371 = vmatprep.subr.bf16.mxu0 0
  %1372 = vmatpush1.bf16.msra.mxu0 0
  %1373 = vmatprep.subr.bf16.mxu0 0
  %1374 = vmatpush1.bf16.msra.mxu0 0
  %1375 = vmatprep.subr.bf16.mxu0 0
  %1376 = vmatpush1.bf16.msra.mxu0 0
  %1377 = vmatprep.subr.bf16.mxu0 0
  %1378 = vmatpush1.bf16.msra.mxu0 0
  %1379 = vmatprep.subr.bf16.mxu0 0
  %1380 = vmatpush1.bf16.msra.mxu0 0
  %1381 = vmatprep.subr.bf16.mxu0 0
  %1382 = vmatpush1.bf16.msra.mxu0 0
  %1383 = vmatprep.subr.bf16.mxu0 0
  %1384 = vmatpush1.bf16.msra.mxu0 0
  %1385 = vmatprep.subr.bf16.mxu0 0
  %1386 = vmatpush1.bf16.msra.mxu0 0
  %1387 = vmatprep.subr.bf16.mxu0 0
  %1388 = vmatpush1.bf16.msra.mxu0 0
  %1389 = vmatprep.subr.bf16.mxu0 0
  %1390 = vmatpush1.bf16.msra.mxu0 0
  %1391 = vmatprep.subr.bf16.mxu0 0
  %1392 = vmatpush1.bf16.msra.mxu0 0
  %1393 = vmatprep.subr.bf16.mxu0 0
  %1394 = vmatpush1.bf16.msra.mxu0 0
  %1395 = vmatprep.mubr.bf16.mxu0 0
  %1396 = vmatmul.mubr.bf16.gmra.mrb[0].mxu0 %v1123
  %v1397 = vpop.f32.mrb[0].mxu0
  %v1398 = vadd.f32 0.0, %v1397
  %v1399 = vpop.f32.mrb[0].mxu0
  %v1400 = vpop.f32.mrb[0].mxu0
  %v1401 = vadd.f32 0.0, %v1400
  %v1402 = vpop.f32.mrb[0].mxu0
  %1403 = vmatprep.mubr.bf16.mxu0 0
  %1404 = vmatmul.mubr.bf16.gmra.mrb[0].mxu0 %v1126
  %v1405 = vpop.f32.mrb[0].mxu0
  %v1406 = vadd.f32 0.0, %v1405
  %v1407 = vpop.f32.mrb[0].mxu0
  %v1408 = vpop.f32.mrb[0].mxu0
  %v1409 = vadd.f32 0.0, %v1408
  %v1410 = vpop.f32.mrb[0].mxu0
  %1411 = vmatprep.mubr.bf16.mxu0 0
  %1412 = vmatmul.mubr.bf16.gmra.mrb[0].mxu0 %v1129
  %v1413 = vpop.f32.mrb[0].mxu0
  %v1414 = vadd.f32 0.0, %v1413
  %v1415 = vpop.f32.mrb[0].mxu0
  %v1416 = vpop.f32.mrb[0].mxu0
  %v1417 = vadd.f32 0.0, %v1416
  %v1418 = vpop.f32.mrb[0].mxu0
  %1419 = vmatprep.mubr.bf16.mxu0 0
  %1420 = vmatmul.mubr.bf16.gmra.mrb[0].mxu0 %v1132
  %v1421 = vpop.f32.mrb[0].mxu0
  %v1422 = vadd.f32 0.0, %v1421
  %v1423 = vpop.f32.mrb[0].mxu0
  %v1424 = vpop.f32.mrb[0].mxu0
  %v1425 = vadd.f32 0.0, %v1424
  %v1426 = vpop.f32.mrb[0].mxu0
  %1427 = vmatprep.mubr.bf16.mxu0 0
  %1428 = vmatmul.mubr.bf16.gmra.mrb[0].mxu0 %v1135
  %v1429 = vpop.f32.mrb[0].mxu0
  %v1430 = vadd.f32 0.0, %v1429
  %v1431 = vpop.f32.mrb[0].mxu0
  %v1432 = vpop.f32.mrb[0].mxu0
  %v1433 = vadd.f32 0.0, %v1432
  %v1434 = vpop.f32.mrb[0].mxu0
  %1435 = vmatprep.mubr.bf16.mxu0 0
  %1436 = vmatmul.mubr.bf16.gmra.mrb[0].mxu0 %v1138
  %v1437 = vpop.f32.mrb[0].mxu0
  %v1438 = vadd.f32 0.0, %v1437
  %v1439 = vpop.f32.mrb[0].mxu0
  %v1440 = vpop.f32.mrb[0].mxu0
  %v1441 = vadd.f32 0.0, %v1440
  %v1442 = vpop.f32.mrb[0].mxu0
  %1443 = vmatprep.mubr.bf16.mxu0 0
  %1444 = vmatmul.mubr.bf16.gmra.mrb[0].mxu0 %v1141
  %v1445 = vpop.f32.mrb[0].mxu0
  %v1446 = vadd.f32 0.0, %v1445
  %v1447 = vpop.f32.mrb[0].mxu0
  %v1448 = vpop.f32.mrb[0].mxu0
  %v1449 = vadd.f32 0.0, %v1448
  %v1450 = vpop.f32.mrb[0].mxu0
  %1451 = vmatprep.mubr.bf16.mxu0 0
  %1452 = vmatmul.mubr.bf16.gmra.mrb[0].mxu0 %v1144
  %v1453 = vpop.f32.mrb[0].mxu0
  %v1454 = vadd.f32 0.0, %v1453
  %v1455 = vpop.f32.mrb[0].mxu0
  %v1456 = vpop.f32.mrb[0].mxu0
  %v1457 = vadd.f32 0.0, %v1456
  %v1458 = vpop.f32.mrb[0].mxu0
  %1459 = vmatprep.mubr.bf16.mxu0 0
  %1460 = vmatmul.mubr.bf16.gmra.mrb[0].mxu0 %v1147
  %v1461 = vpop.f32.mrb[0].mxu0
  %v1462 = vadd.f32 0.0, %v1461
  %v1463 = vpop.f32.mrb[0].mxu0
  %v1464 = vpop.f32.mrb[0].mxu0
  %v1465 = vadd.f32 0.0, %v1464
  %v1466 = vpop.f32.mrb[0].mxu0
  %1467 = vmatprep.mubr.bf16.mxu0 0
  %1468 = vmatmul.mubr.bf16.gmra.mrb[0].mxu0 %v1150
  %v1469 = vpop.f32.mrb[0].mxu0
  %v1470 = vadd.f32 0.0, %v1469
  %v1471 = vpop.f32.mrb[0].mxu0
  %v1472 = vpop.f32.mrb[0].mxu0
  %v1473 = vadd.f32 0.0, %v1472
  %v1474 = vpop.f32.mrb[0].mxu0
  %1475 = vmatprep.mubr.bf16.mxu0 0
  %1476 = vmatmul.mubr.bf16.gmra.mrb[0].mxu0 %v1153
  %v1477 = vpop.f32.mrb[0].mxu0
  %v1478 = vadd.f32 0.0, %v1477
  %v1479 = vpop.f32.mrb[0].mxu0
  %v1480 = vpop.f32.mrb[0].mxu0
  %v1481 = vadd.f32 0.0, %v1480
  %v1482 = vpop.f32.mrb[0].mxu0
  %1483 = vmatprep.mubr.bf16.mxu0 0
  %1484 = vmatmul.mubr.bf16.gmra.mrb[0].mxu0 %v1156
  %v1485 = vpop.f32.mrb[0].mxu0
  %v1486 = vadd.f32 0.0, %v1485
  %v1487 = vpop.f32.mrb[0].mxu0
  %v1488 = vpop.f32.mrb[0].mxu0
  %v1489 = vadd.f32 0.0, %v1488
  %v1490 = vpop.f32.mrb[0].mxu0
  %1491 = vmatprep.mubr.bf16.mxu0 0
  %1492 = vmatmul.mubr.bf16.gmra.mrb[0].mxu0 %v1159
  %v1493 = vpop.f32.mrb[0].mxu0
  %v1494 = vadd.f32 0.0, %v1493
  %v1495 = vpop.f32.mrb[0].mxu0
  %v1496 = vpop.f32.mrb[0].mxu0
  %v1497 = vadd.f32 0.0, %v1496
  %v1498 = vpop.f32.mrb[0].mxu0
  %1499 = vmatprep.mubr.bf16.mxu0 0
  %1500 = vmatmul.mubr.bf16.gmra.mrb[0].mxu0 %v1162
  %v1501 = vpop.f32.mrb[0].mxu0
  %v1502 = vadd.f32 0.0, %v1501
  %v1503 = vpop.f32.mrb[0].mxu0
  %v1504 = vpop.f32.mrb[0].mxu0
  %v1505 = vadd.f32 0.0, %v1504
  %v1506 = vpop.f32.mrb[0].mxu0
  %1507 = vmatprep.mubr.bf16.mxu0 0
  %1508 = vmatmul.mubr.bf16.gmra.mrb[0].mxu0 %v1165
  %v1509 = vpop.f32.mrb[0].mxu0
  %v1510 = vadd.f32 0.0, %v1509
  %v1511 = vpop.f32.mrb[0].mxu0
  %v1512 = vpop.f32.mrb[0].mxu0
  %v1513 = vadd.f32 0.0, %v1512
  %v1514 = vpop.f32.mrb[0].mxu0
  %1515 = vmatprep.mubr.bf16.mxu0 0
  %1516 = vmatmul.mubr.bf16.gmra.mrb[0].mxu0 %v1168
  %v1517 = vpop.f32.mrb[0].mxu0
  %v1518 = vadd.f32 0.0, %v1517
  %v1519 = vpop.f32.mrb[0].mxu0
  %v1520 = vpop.f32.mrb[0].mxu0
  %v1521 = vadd.f32 0.0, %v1520
  %v1522 = vpop.f32.mrb[0].mxu0
  %1523 = vdwg.mxu0
  %v1528 = vunpack.c.l.b16 %v1098
  %v1529 = vunpack.c.h.b16 %v1098
  %v1530 = vunpack.c.l.b16 %v1099
  %v1531 = vunpack.c.l.b16 %v1100
  %v1532 = vunpack.c.h.b16 %v1100
  %v1533 = vunpack.c.l.b16 %v1101
  %v1534 = vpack.c.b16 %v1531, %v1528
  %v1535 = vpack.c.b16 %v1532, %v1529
  %v1536 = vpack.c.b16 %v1533, %v1530
  %1540 = vmatprep.subr.bf16.mxu0 %v1535
  %1541 = vmatpush1.bf16.msra.mxu0 %v1534
  %1542 = vmatprep.subr.bf16.mxu0 0
  %1543 = vmatpush1.bf16.msra.mxu0 0
  %1544 = vmatprep.subr.bf16.mxu0 0
  %1545 = vmatpush1.bf16.msra.mxu0 0
  %1546 = vmatprep.subr.bf16.mxu0 0
  %1547 = vmatpush1.bf16.msra.mxu0 0
  %1548 = vmatprep.subr.bf16.mxu0 0
  %1549 = vmatpush1.bf16.msra.mxu0 0
  %1550 = vmatprep.subr.bf16.mxu0 0
  %1551 = vmatpush1.bf16.msra.mxu0 0
  %1552 = vmatprep.subr.bf16.mxu0 0
  %1553 = vmatpush1.bf16.msra.mxu0 0
  %1554 = vmatprep.subr.bf16.mxu0 0
  %1555 = vmatpush1.bf16.msra.mxu0 0
  %1556 = vmatprep.subr.bf16.mxu0 0
  %1557 = vmatpush1.bf16.msra.mxu0 0
  %1558 = vmatprep.subr.bf16.mxu0 0
  %1559 = vmatpush1.bf16.msra.mxu0 0
  %1560 = vmatprep.subr.bf16.mxu0 0
  %1561 = vmatpush1.bf16.msra.mxu0 0
  %1562 = vmatprep.subr.bf16.mxu0 0
  %1563 = vmatpush1.bf16.msra.mxu0 0
  %1564 = vmatprep.subr.bf16.mxu0 0
  %1565 = vmatpush1.bf16.msra.mxu0 0
  %1566 = vmatprep.subr.bf16.mxu0 0
  %1567 = vmatpush1.bf16.msra.mxu0 0
  %1568 = vmatprep.subr.bf16.mxu0 0
  %1569 = vmatpush1.bf16.msra.mxu0 0
  %1570 = vmatprep.subr.bf16.mxu0 0
  %1571 = vmatpush1.bf16.msra.mxu0 0
  %1572 = vmatprep.mubr.bf16.mxu0 0
  %1573 = vmatmul.mubr.bf16.gmra.mrb[0].mxu0 %v184
  %v1574 = vpop.f32.mrb[0].mxu0
  %v1575 = vadd.f32 %v1205, %v1574
  %v1576 = vpop.f32.mrb[0].mxu0
  %v1577 = vadd.f32 %v1207, %v1576
  %v1578 = vpop.f32.mrb[0].mxu0
  %v1579 = vadd.f32 %v1209, %v1578
  %v1580 = vpop.f32.mrb[0].mxu0
  %v1581 = vadd.f32 %v1211, %v1580
  %1582 = vmatprep.mubr.bf16.mxu0 0
  %1583 = vmatmul.mubr.bf16.gmra.mrb[0].mxu0 %v187
  %v1584 = vpop.f32.mrb[0].mxu0
  %v1585 = vadd.f32 %v1215, %v1584
  %v1586 = vpop.f32.mrb[0].mxu0
  %v1587 = vadd.f32 %v1217, %v1586
  %v1588 = vpop.f32.mrb[0].mxu0
  %v1589 = vadd.f32 %v1219, %v1588
  %v1590 = vpop.f32.mrb[0].mxu0
  %v1591 = vadd.f32 %v1221, %v1590
  %1592 = vmatprep.mubr.bf16.mxu0 0
  %1593 = vmatmul.mubr.bf16.gmra.mrb[0].mxu0 %v190
  %v1594 = vpop.f32.mrb[0].mxu0
  %v1595 = vadd.f32 %v1225, %v1594
  %v1596 = vpop.f32.mrb[0].mxu0
  %v1597 = vadd.f32 %v1227, %v1596
  %v1598 = vpop.f32.mrb[0].mxu0
  %v1599 = vadd.f32 %v1229, %v1598
  %v1600 = vpop.f32.mrb[0].mxu0
  %v1601 = vadd.f32 %v1231, %v1600
  %1602 = vmatprep.mubr.bf16.mxu0 0
  %1603 = vmatmul.mubr.bf16.gmra.mrb[0].mxu0 %v193
  %v1604 = vpop.f32.mrb[0].mxu0
  %v1605 = vadd.f32 %v1235, %v1604
  %v1606 = vpop.f32.mrb[0].mxu0
  %v1607 = vadd.f32 %v1237, %v1606
  %v1608 = vpop.f32.mrb[0].mxu0
  %v1609 = vadd.f32 %v1239, %v1608
  %v1610 = vpop.f32.mrb[0].mxu0
  %v1611 = vadd.f32 %v1241, %v1610
  %1612 = vmatprep.mubr.bf16.mxu0 0
  %1613 = vmatmul.mubr.bf16.gmra.mrb[0].mxu0 %v196
  %v1614 = vpop.f32.mrb[0].mxu0
  %v1615 = vadd.f32 %v1245, %v1614
  %v1616 = vpop.f32.mrb[0].mxu0
  %v1617 = vadd.f32 %v1247, %v1616
  %v1618 = vpop.f32.mrb[0].mxu0
  %v1619 = vadd.f32 %v1249, %v1618
  %v1620 = vpop.f32.mrb[0].mxu0
  %v1621 = vadd.f32 %v1251, %v1620
  %1622 = vmatprep.mubr.bf16.mxu0 0
  %1623 = vmatmul.mubr.bf16.gmra.mrb[0].mxu0 %v199
  %v1624 = vpop.f32.mrb[0].mxu0
  %v1625 = vadd.f32 %v1255, %v1624
  %v1626 = vpop.f32.mrb[0].mxu0
  %v1627 = vadd.f32 %v1257, %v1626
  %v1628 = vpop.f32.mrb[0].mxu0
  %v1629 = vadd.f32 %v1259, %v1628
  %v1630 = vpop.f32.mrb[0].mxu0
  %v1631 = vadd.f32 %v1261, %v1630
  %1632 = vmatprep.mubr.bf16.mxu0 0
  %1633 = vmatmul.mubr.bf16.gmra.mrb[0].mxu0 %v202
  %v1634 = vpop.f32.mrb[0].mxu0
  %v1635 = vadd.f32 %v1265, %v1634
  %v1636 = vpop.f32.mrb[0].mxu0
  %v1637 = vadd.f32 %v1267, %v1636
  %v1638 = vpop.f32.mrb[0].mxu0
  %v1639 = vadd.f32 %v1269, %v1638
  %v1640 = vpop.f32.mrb[0].mxu0
  %v1641 = vadd.f32 %v1271, %v1640
  %1642 = vmatprep.mubr.bf16.mxu0 0
  %1643 = vmatmul.mubr.bf16.gmra.mrb[0].mxu0 %v205
  %v1644 = vpop.f32.mrb[0].mxu0
  %v1645 = vadd.f32 %v1275, %v1644
  %v1646 = vpop.f32.mrb[0].mxu0
  %v1647 = vadd.f32 %v1277, %v1646
  %v1648 = vpop.f32.mrb[0].mxu0
  %v1649 = vadd.f32 %v1279, %v1648
  %v1650 = vpop.f32.mrb[0].mxu0
  %v1651 = vadd.f32 %v1281, %v1650
  %1652 = vmatprep.mubr.bf16.mxu0 0
  %1653 = vmatmul.mubr.bf16.gmra.mrb[0].mxu0 %v208
  %v1654 = vpop.f32.mrb[0].mxu0
  %v1655 = vadd.f32 %v1285, %v1654
  %v1656 = vpop.f32.mrb[0].mxu0
  %v1657 = vadd.f32 %v1287, %v1656
  %v1658 = vpop.f32.mrb[0].mxu0
  %v1659 = vadd.f32 %v1289, %v1658
  %v1660 = vpop.f32.mrb[0].mxu0
  %v1661 = vadd.f32 %v1291, %v1660
  %1662 = vmatprep.mubr.bf16.mxu0 0
  %1663 = vmatmul.mubr.bf16.gmra.mrb[0].mxu0 %v211
  %v1664 = vpop.f32.mrb[0].mxu0
  %v1665 = vadd.f32 %v1295, %v1664
  %v1666 = vpop.f32.mrb[0].mxu0
  %v1667 = vadd.f32 %v1297, %v1666
  %v1668 = vpop.f32.mrb[0].mxu0
  %v1669 = vadd.f32 %v1299, %v1668
  %v1670 = vpop.f32.mrb[0].mxu0
  %v1671 = vadd.f32 %v1301, %v1670
  %1672 = vmatprep.mubr.bf16.mxu0 0
  %1673 = vmatmul.mubr.bf16.gmra.mrb[0].mxu0 %v214
  %v1674 = vpop.f32.mrb[0].mxu0
  %v1675 = vadd.f32 %v1305, %v1674
  %v1676 = vpop.f32.mrb[0].mxu0
  %v1677 = vadd.f32 %v1307, %v1676
  %v1678 = vpop.f32.mrb[0].mxu0
  %v1679 = vadd.f32 %v1309, %v1678
  %v1680 = vpop.f32.mrb[0].mxu0
  %v1681 = vadd.f32 %v1311, %v1680
  %1682 = vmatprep.mubr.bf16.mxu0 0
  %1683 = vmatmul.mubr.bf16.gmra.mrb[0].mxu0 %v217
  %v1684 = vpop.f32.mrb[0].mxu0
  %v1685 = vadd.f32 %v1315, %v1684
  %v1686 = vpop.f32.mrb[0].mxu0
  %v1687 = vadd.f32 %v1317, %v1686
  %v1688 = vpop.f32.mrb[0].mxu0
  %v1689 = vadd.f32 %v1319, %v1688
  %v1690 = vpop.f32.mrb[0].mxu0
  %v1691 = vadd.f32 %v1321, %v1690
  %1692 = vmatprep.mubr.bf16.mxu0 0
  %1693 = vmatmul.mubr.bf16.gmra.mrb[0].mxu0 %v220
  %v1694 = vpop.f32.mrb[0].mxu0
  %v1695 = vadd.f32 %v1325, %v1694
  %v1696 = vpop.f32.mrb[0].mxu0
  %v1697 = vadd.f32 %v1327, %v1696
  %v1698 = vpop.f32.mrb[0].mxu0
  %v1699 = vadd.f32 %v1329, %v1698
  %v1700 = vpop.f32.mrb[0].mxu0
  %v1701 = vadd.f32 %v1331, %v1700
  %1702 = vmatprep.mubr.bf16.mxu0 0
  %1703 = vmatmul.mubr.bf16.gmra.mrb[0].mxu0 %v223
  %v1704 = vpop.f32.mrb[0].mxu0
  %v1705 = vadd.f32 %v1335, %v1704
  %v1706 = vpop.f32.mrb[0].mxu0
  %v1707 = vadd.f32 %v1337, %v1706
  %v1708 = vpop.f32.mrb[0].mxu0
  %v1709 = vadd.f32 %v1339, %v1708
  %v1710 = vpop.f32.mrb[0].mxu0
  %v1711 = vadd.f32 %v1341, %v1710
  %1712 = vmatprep.mubr.bf16.mxu0 0
  %1713 = vmatmul.mubr.bf16.gmra.mrb[0].mxu0 %v226
  %v1714 = vpop.f32.mrb[0].mxu0
  %v1715 = vadd.f32 %v1345, %v1714
  %v1716 = vpop.f32.mrb[0].mxu0
  %v1717 = vadd.f32 %v1347, %v1716
  %v1718 = vpop.f32.mrb[0].mxu0
  %v1719 = vadd.f32 %v1349, %v1718
  %v1720 = vpop.f32.mrb[0].mxu0
  %v1721 = vadd.f32 %v1351, %v1720
  %1722 = vmatprep.mubr.bf16.mxu0 0
  %1723 = vmatmul.mubr.bf16.gmra.mrb[0].mxu0 %v229
  %v1724 = vpop.f32.mrb[0].mxu0
  %v1725 = vadd.f32 %v1355, %v1724
  %v1726 = vpop.f32.mrb[0].mxu0
  %v1727 = vadd.f32 %v1357, %v1726
  %v1728 = vpop.f32.mrb[0].mxu0
  %v1729 = vadd.f32 %v1359, %v1728
  %v1730 = vpop.f32.mrb[0].mxu0
  %v1731 = vadd.f32 %v1361, %v1730
  %1732 = vdwg.mxu0
  %1733 = vmatprep.subr.bf16.mxu0 0
  %1734 = vmatpush1.bf16.msra.mxu0 %v1536
  %1735 = vmatprep.subr.bf16.mxu0 0
  %1736 = vmatpush1.bf16.msra.mxu0 0
  %1737 = vmatprep.subr.bf16.mxu0 0
  %1738 = vmatpush1.bf16.msra.mxu0 0
  %1739 = vmatprep.subr.bf16.mxu0 0
  %1740 = vmatpush1.bf16.msra.mxu0 0
  %1741 = vmatprep.subr.bf16.mxu0 0
  %1742 = vmatpush1.bf16.msra.mxu0 0
  %1743 = vmatprep.subr.bf16.mxu0 0
  %1744 = vmatpush1.bf16.msra.mxu0 0
  %1745 = vmatprep.subr.bf16.mxu0 0
  %1746 = vmatpush1.bf16.msra.mxu0 0
  %1747 = vmatprep.subr.bf16.mxu0 0
  %1748 = vmatpush1.bf16.msra.mxu0 0
  %1749 = vmatprep.subr.bf16.mxu0 0
  %1750 = vmatpush1.bf16.msra.mxu0 0
  %1751 = vmatprep.subr.bf16.mxu0 0
  %1752 = vmatpush1.bf16.msra.mxu0 0
  %1753 = vmatprep.subr.bf16.mxu0 0
  %1754 = vmatpush1.bf16.msra.mxu0 0
  %1755 = vmatprep.subr.bf16.mxu0 0
  %1756 = vmatpush1.bf16.msra.mxu0 0
  %1757 = vmatprep.subr.bf16.mxu0 0
  %1758 = vmatpush1.bf16.msra.mxu0 0
  %1759 = vmatprep.subr.bf16.mxu0 0
  %1760 = vmatpush1.bf16.msra.mxu0 0
  %1761 = vmatprep.subr.bf16.mxu0 0
  %1762 = vmatpush1.bf16.msra.mxu0 0
  %1763 = vmatprep.subr.bf16.mxu0 0
  %1764 = vmatpush1.bf16.msra.mxu0 0
  %1765 = vmatprep.mubr.bf16.mxu0 0
  %1766 = vmatmul.mubr.bf16.gmra.mrb[0].mxu0 %v184
  %v1767 = vpop.f32.mrb[0].mxu0
  %v1768 = vadd.f32 %v1398, %v1767
  %v1769 = vpop.f32.mrb[0].mxu0
  %v1770 = vpop.f32.mrb[0].mxu0
  %v1771 = vadd.f32 %v1401, %v1770
  %v1772 = vpop.f32.mrb[0].mxu0
  %1773 = vmatprep.mubr.bf16.mxu0 0
  %1774 = vmatmul.mubr.bf16.gmra.mrb[0].mxu0 %v187
  %v1775 = vpop.f32.mrb[0].mxu0
  %v1776 = vadd.f32 %v1406, %v1775
  %v1777 = vpop.f32.mrb[0].mxu0
  %v1778 = vpop.f32.mrb[0].mxu0
  %v1779 = vadd.f32 %v1409, %v1778
  %v1780 = vpop.f32.mrb[0].mxu0
  %1781 = vmatprep.mubr.bf16.mxu0 0
  %1782 = vmatmul.mubr.bf16.gmra.mrb[0].mxu0 %v190
  %v1783 = vpop.f32.mrb[0].mxu0
  %v1784 = vadd.f32 %v1414, %v1783
  %v1785 = vpop.f32.mrb[0].mxu0
  %v1786 = vpop.f32.mrb[0].mxu0
  %v1787 = vadd.f32 %v1417, %v1786
  %v1788 = vpop.f32.mrb[0].mxu0
  %1789 = vmatprep.mubr.bf16.mxu0 0
  %1790 = vmatmul.mubr.bf16.gmra.mrb[0].mxu0 %v193
  %v1791 = vpop.f32.mrb[0].mxu0
  %v1792 = vadd.f32 %v1422, %v1791
  %v1793 = vpop.f32.mrb[0].mxu0
  %v1794 = vpop.f32.mrb[0].mxu0
  %v1795 = vadd.f32 %v1425, %v1794
  %v1796 = vpop.f32.mrb[0].mxu0
  %1797 = vmatprep.mubr.bf16.mxu0 0
  %1798 = vmatmul.mubr.bf16.gmra.mrb[0].mxu0 %v196
  %v1799 = vpop.f32.mrb[0].mxu0
  %v1800 = vadd.f32 %v1430, %v1799
  %v1801 = vpop.f32.mrb[0].mxu0
  %v1802 = vpop.f32.mrb[0].mxu0
  %v1803 = vadd.f32 %v1433, %v1802
  %v1804 = vpop.f32.mrb[0].mxu0
  %1805 = vmatprep.mubr.bf16.mxu0 0
  %1806 = vmatmul.mubr.bf16.gmra.mrb[0].mxu0 %v199
  %v1807 = vpop.f32.mrb[0].mxu0
  %v1808 = vadd.f32 %v1438, %v1807
  %v1809 = vpop.f32.mrb[0].mxu0
  %v1810 = vpop.f32.mrb[0].mxu0
  %v1811 = vadd.f32 %v1441, %v1810
  %v1812 = vpop.f32.mrb[0].mxu0
  %1813 = vmatprep.mubr.bf16.mxu0 0
  %1814 = vmatmul.mubr.bf16.gmra.mrb[0].mxu0 %v202
  %v1815 = vpop.f32.mrb[0].mxu0
  %v1816 = vadd.f32 %v1446, %v1815
  %v1817 = vpop.f32.mrb[0].mxu0
  %v1818 = vpop.f32.mrb[0].mxu0
  %v1819 = vadd.f32 %v1449, %v1818
  %v1820 = vpop.f32.mrb[0].mxu0
  %1821 = vmatprep.mubr.bf16.mxu0 0
  %1822 = vmatmul.mubr.bf16.gmra.mrb[0].mxu0 %v205
  %v1823 = vpop.f32.mrb[0].mxu0
  %v1824 = vadd.f32 %v1454, %v1823
  %v1825 = vpop.f32.mrb[0].mxu0
  %v1826 = vpop.f32.mrb[0].mxu0
  %v1827 = vadd.f32 %v1457, %v1826
  %v1828 = vpop.f32.mrb[0].mxu0
  %1829 = vmatprep.mubr.bf16.mxu0 0
  %1830 = vmatmul.mubr.bf16.gmra.mrb[0].mxu0 %v208
  %v1831 = vpop.f32.mrb[0].mxu0
  %v1832 = vadd.f32 %v1462, %v1831
  %v1833 = vpop.f32.mrb[0].mxu0
  %v1834 = vpop.f32.mrb[0].mxu0
  %v1835 = vadd.f32 %v1465, %v1834
  %v1836 = vpop.f32.mrb[0].mxu0
  %1837 = vmatprep.mubr.bf16.mxu0 0
  %1838 = vmatmul.mubr.bf16.gmra.mrb[0].mxu0 %v211
  %v1839 = vpop.f32.mrb[0].mxu0
  %v1840 = vadd.f32 %v1470, %v1839
  %v1841 = vpop.f32.mrb[0].mxu0
  %v1842 = vpop.f32.mrb[0].mxu0
  %v1843 = vadd.f32 %v1473, %v1842
  %v1844 = vpop.f32.mrb[0].mxu0
  %1845 = vmatprep.mubr.bf16.mxu0 0
  %1846 = vmatmul.mubr.bf16.gmra.mrb[0].mxu0 %v214
  %v1847 = vpop.f32.mrb[0].mxu0
  %v1848 = vadd.f32 %v1478, %v1847
  %v1849 = vpop.f32.mrb[0].mxu0
  %v1850 = vpop.f32.mrb[0].mxu0
  %v1851 = vadd.f32 %v1481, %v1850
  %v1852 = vpop.f32.mrb[0].mxu0
  %1853 = vmatprep.mubr.bf16.mxu0 0
  %1854 = vmatmul.mubr.bf16.gmra.mrb[0].mxu0 %v217
  %v1855 = vpop.f32.mrb[0].mxu0
  %v1856 = vadd.f32 %v1486, %v1855
  %v1857 = vpop.f32.mrb[0].mxu0
  %v1858 = vpop.f32.mrb[0].mxu0
  %v1859 = vadd.f32 %v1489, %v1858
  %v1860 = vpop.f32.mrb[0].mxu0
  %1861 = vmatprep.mubr.bf16.mxu0 0
  %1862 = vmatmul.mubr.bf16.gmra.mrb[0].mxu0 %v220
  %v1863 = vpop.f32.mrb[0].mxu0
  %v1864 = vadd.f32 %v1494, %v1863
  %v1865 = vpop.f32.mrb[0].mxu0
  %v1866 = vpop.f32.mrb[0].mxu0
  %v1867 = vadd.f32 %v1497, %v1866
  %v1868 = vpop.f32.mrb[0].mxu0
  %1869 = vmatprep.mubr.bf16.mxu0 0
  %1870 = vmatmul.mubr.bf16.gmra.mrb[0].mxu0 %v223
  %v1871 = vpop.f32.mrb[0].mxu0
  %v1872 = vadd.f32 %v1502, %v1871
  %v1873 = vpop.f32.mrb[0].mxu0
  %v1874 = vpop.f32.mrb[0].mxu0
  %v1875 = vadd.f32 %v1505, %v1874
  %v1876 = vpop.f32.mrb[0].mxu0
  %1877 = vmatprep.mubr.bf16.mxu0 0
  %1878 = vmatmul.mubr.bf16.gmra.mrb[0].mxu0 %v226
  %v1879 = vpop.f32.mrb[0].mxu0
  %v1880 = vadd.f32 %v1510, %v1879
  %v1881 = vpop.f32.mrb[0].mxu0
  %v1882 = vpop.f32.mrb[0].mxu0
  %v1883 = vadd.f32 %v1513, %v1882
  %v1884 = vpop.f32.mrb[0].mxu0
  %1885 = vmatprep.mubr.bf16.mxu0 0
  %1886 = vmatmul.mubr.bf16.gmra.mrb[0].mxu0 %v229
  %v1887 = vpop.f32.mrb[0].mxu0
  %v1888 = vadd.f32 %v1518, %v1887
  %v1889 = vpop.f32.mrb[0].mxu0
  %v1890 = vpop.f32.mrb[0].mxu0
  %v1891 = vadd.f32 %v1521, %v1890
  %v1892 = vpop.f32.mrb[0].mxu0
  %1893 = vdwg.mxu0
  %v1894 = vld [vmem:[%s7] sm:$0x7]
  %v1896 = vlaneseq
  %v1897 = vshrl.u32 %v1896, 7
  %v1898 = vsub.s32 0, %v1897
  %v1899 = vrot.slane %v1894, %v1898
  %v1900 = vlaneseq
  %v1901 = vshrl.u32 %v1900, 7
  %v1902 = vsub.s32 1, %v1901
  %v1903 = vrot.slane %v1894, %v1902
  %v1904 = vlaneseq
  %v1905 = vshrl.u32 %v1904, 7
  %v1906 = vsub.s32 2, %v1905
  %v1907 = vrot.slane %v1894, %v1906
  %v1911 = vadd.f32 %v1575, %v1899
  %v1912 = vadd.f32 %v1577, %v1903
  %v1913 = vadd.f32 %v1768, %v1907
  %v1914 = vadd.f32 %v1579, %v1899
  %v1915 = vadd.f32 %v1581, %v1903
  %v1916 = vadd.f32 %v1771, %v1907
  %v1917 = vadd.f32 %v1585, %v1899
  %v1918 = vadd.f32 %v1587, %v1903
  %v1919 = vadd.f32 %v1776, %v1907
  %v1920 = vadd.f32 %v1589, %v1899
  %v1921 = vadd.f32 %v1591, %v1903
  %v1922 = vadd.f32 %v1779, %v1907
  %v1923 = vadd.f32 %v1595, %v1899
  %v1924 = vadd.f32 %v1597, %v1903
  %v1925 = vadd.f32 %v1784, %v1907
  %v1926 = vadd.f32 %v1599, %v1899
  %v1927 = vadd.f32 %v1601, %v1903
  %v1928 = vadd.f32 %v1787, %v1907
  %v1929 = vadd.f32 %v1605, %v1899
  %v1930 = vadd.f32 %v1607, %v1903
  %v1931 = vadd.f32 %v1792, %v1907
  %v1932 = vadd.f32 %v1609, %v1899
  %v1933 = vadd.f32 %v1611, %v1903
  %v1934 = vadd.f32 %v1795, %v1907
  %v1935 = vadd.f32 %v1615, %v1899
  %v1936 = vadd.f32 %v1617, %v1903
  %v1937 = vadd.f32 %v1800, %v1907
  %v1938 = vadd.f32 %v1619, %v1899
  %v1939 = vadd.f32 %v1621, %v1903
  %v1940 = vadd.f32 %v1803, %v1907
  %v1941 = vadd.f32 %v1625, %v1899
  %v1942 = vadd.f32 %v1627, %v1903
  %v1943 = vadd.f32 %v1808, %v1907
  %v1944 = vadd.f32 %v1629, %v1899
  %v1945 = vadd.f32 %v1631, %v1903
  %v1946 = vadd.f32 %v1811, %v1907
  %v1947 = vadd.f32 %v1635, %v1899
  %v1948 = vadd.f32 %v1637, %v1903
  %v1949 = vadd.f32 %v1816, %v1907
  %v1950 = vadd.f32 %v1639, %v1899
  %v1951 = vadd.f32 %v1641, %v1903
  %v1952 = vadd.f32 %v1819, %v1907
  %v1953 = vadd.f32 %v1645, %v1899
  %v1954 = vadd.f32 %v1647, %v1903
  %v1955 = vadd.f32 %v1824, %v1907
  %v1956 = vadd.f32 %v1649, %v1899
  %v1957 = vadd.f32 %v1651, %v1903
  %v1958 = vadd.f32 %v1827, %v1907
  %v1959 = vadd.f32 %v1655, %v1899
  %v1960 = vadd.f32 %v1657, %v1903
  %v1961 = vadd.f32 %v1832, %v1907
  %v1962 = vadd.f32 %v1659, %v1899
  %v1963 = vadd.f32 %v1661, %v1903
  %v1964 = vadd.f32 %v1835, %v1907
  %v1965 = vadd.f32 %v1665, %v1899
  %v1966 = vadd.f32 %v1667, %v1903
  %v1967 = vadd.f32 %v1840, %v1907
  %v1968 = vadd.f32 %v1669, %v1899
  %v1969 = vadd.f32 %v1671, %v1903
  %v1970 = vadd.f32 %v1843, %v1907
  %v1971 = vadd.f32 %v1675, %v1899
  %v1972 = vadd.f32 %v1677, %v1903
  %v1973 = vadd.f32 %v1848, %v1907
  %v1974 = vadd.f32 %v1679, %v1899
  %v1975 = vadd.f32 %v1681, %v1903
  %v1976 = vadd.f32 %v1851, %v1907
  %v1977 = vadd.f32 %v1685, %v1899
  %v1978 = vadd.f32 %v1687, %v1903
  %v1979 = vadd.f32 %v1856, %v1907
  %v1980 = vadd.f32 %v1689, %v1899
  %v1981 = vadd.f32 %v1691, %v1903
  %v1982 = vadd.f32 %v1859, %v1907
  %v1983 = vadd.f32 %v1695, %v1899
  %v1984 = vadd.f32 %v1697, %v1903
  %v1985 = vadd.f32 %v1864, %v1907
  %v1986 = vadd.f32 %v1699, %v1899
  %v1987 = vadd.f32 %v1701, %v1903
  %v1988 = vadd.f32 %v1867, %v1907
  %v1989 = vadd.f32 %v1705, %v1899
  %v1990 = vadd.f32 %v1707, %v1903
  %v1991 = vadd.f32 %v1872, %v1907
  %v1992 = vadd.f32 %v1709, %v1899
  %v1993 = vadd.f32 %v1711, %v1903
  %v1994 = vadd.f32 %v1875, %v1907
  %v1995 = vadd.f32 %v1715, %v1899
  %v1996 = vadd.f32 %v1717, %v1903
  %v1997 = vadd.f32 %v1880, %v1907
  %v1998 = vadd.f32 %v1719, %v1899
  %v1999 = vadd.f32 %v1721, %v1903
  %v2000 = vadd.f32 %v1883, %v1907
  %v2001 = vadd.f32 %v1725, %v1899
  %v2002 = vadd.f32 %v1727, %v1903
  %v2003 = vadd.f32 %v1888, %v1907
  %v2004 = vadd.f32 %v1729, %v1899
  %v2005 = vadd.f32 %v1731, %v1903
  %v2006 = vadd.f32 %v1891, %v1907
  %v2007 = vmax.f32 %v1911, 0.0
  %v2008 = vmax.f32 %v1912, 0.0
  %v2009 = vmax.f32 %v1913, 0.0
  %v2010 = vmax.f32 %v1914, 0.0
  %v2011 = vmax.f32 %v1915, 0.0
  %v2012 = vmax.f32 %v1916, 0.0
  %v2013 = vmax.f32 %v1917, 0.0
  %v2014 = vmax.f32 %v1918, 0.0
  %v2015 = vmax.f32 %v1919, 0.0
  %v2016 = vmax.f32 %v1920, 0.0
  %v2017 = vmax.f32 %v1921, 0.0
  %v2018 = vmax.f32 %v1922, 0.0
  %v2019 = vmax.f32 %v1923, 0.0
  %v2020 = vmax.f32 %v1924, 0.0
  %v2021 = vmax.f32 %v1925, 0.0
  %v2022 = vmax.f32 %v1926, 0.0
  %v2023 = vmax.f32 %v1927, 0.0
  %v2024 = vmax.f32 %v1928, 0.0
  %v2025 = vmax.f32 %v1929, 0.0
  %v2026 = vmax.f32 %v1930, 0.0
  %v2027 = vmax.f32 %v1931, 0.0
  %v2028 = vmax.f32 %v1932, 0.0
  %v2029 = vmax.f32 %v1933, 0.0
  %v2030 = vmax.f32 %v1934, 0.0
  %v2031 = vmax.f32 %v1935, 0.0
  %v2032 = vmax.f32 %v1936, 0.0
  %v2033 = vmax.f32 %v1937, 0.0
  %v2034 = vmax.f32 %v1938, 0.0
  %v2035 = vmax.f32 %v1939, 0.0
  %v2036 = vmax.f32 %v1940, 0.0
  %v2037 = vmax.f32 %v1941, 0.0
  %v2038 = vmax.f32 %v1942, 0.0
  %v2039 = vmax.f32 %v1943, 0.0
  %v2040 = vmax.f32 %v1944, 0.0
  %v2041 = vmax.f32 %v1945, 0.0
  %v2042 = vmax.f32 %v1946, 0.0
  %v2043 = vmax.f32 %v1947, 0.0
  %v2044 = vmax.f32 %v1948, 0.0
  %v2045 = vmax.f32 %v1949, 0.0
  %v2046 = vmax.f32 %v1950, 0.0
  %v2047 = vmax.f32 %v1951, 0.0
  %v2048 = vmax.f32 %v1952, 0.0
  %v2049 = vmax.f32 %v1953, 0.0
  %v2050 = vmax.f32 %v1954, 0.0
  %v2051 = vmax.f32 %v1955, 0.0
  %v2052 = vmax.f32 %v1956, 0.0
  %v2053 = vmax.f32 %v1957, 0.0
  %v2054 = vmax.f32 %v1958, 0.0
  %v2055 = vmax.f32 %v1959, 0.0
  %v2056 = vmax.f32 %v1960, 0.0
  %v2057 = vmax.f32 %v1961, 0.0
  %v2058 = vmax.f32 %v1962, 0.0
  %v2059 = vmax.f32 %v1963, 0.0
  %v2060 = vmax.f32 %v1964, 0.0
  %v2061 = vmax.f32 %v1965, 0.0
  %v2062 = vmax.f32 %v1966, 0.0
  %v2063 = vmax.f32 %v1967, 0.0
  %v2064 = vmax.f32 %v1968, 0.0
  %v2065 = vmax.f32 %v1969, 0.0
  %v2066 = vmax.f32 %v1970, 0.0
  %v2067 = vmax.f32 %v1971, 0.0
  %v2068 = vmax.f32 %v1972, 0.0
  %v2069 = vmax.f32 %v1973, 0.0
  %v2070 = vmax.f32 %v1974, 0.0
  %v2071 = vmax.f32 %v1975, 0.0
  %v2072 = vmax.f32 %v1976, 0.0
  %v2073 = vmax.f32 %v1977, 0.0
  %v2074 = vmax.f32 %v1978, 0.0
  %v2075 = vmax.f32 %v1979, 0.0
  %v2076 = vmax.f32 %v1980, 0.0
  %v2077 = vmax.f32 %v1981, 0.0
  %v2078 = vmax.f32 %v1982, 0.0
  %v2079 = vmax.f32 %v1983, 0.0
  %v2080 = vmax.f32 %v1984, 0.0
  %v2081 = vmax.f32 %v1985, 0.0
  %v2082 = vmax.f32 %v1986, 0.0
  %v2083 = vmax.f32 %v1987, 0.0
  %v2084 = vmax.f32 %v1988, 0.0
  %v2085 = vmax.f32 %v1989, 0.0
  %v2086 = vmax.f32 %v1990, 0.0
  %v2087 = vmax.f32 %v1991, 0.0
  %v2088 = vmax.f32 %v1992, 0.0
  %v2089 = vmax.f32 %v1993, 0.0
  %v2090 = vmax.f32 %v1994, 0.0
  %v2091 = vmax.f32 %v1995, 0.0
  %v2092 = vmax.f32 %v1996, 0.0
  %v2093 = vmax.f32 %v1997, 0.0
  %v2094 = vmax.f32 %v1998, 0.0
  %v2095 = vmax.f32 %v1999, 0.0
  %v2096 = vmax.f32 %v2000, 0.0
  %v2097 = vmax.f32 %v2001, 0.0
  %v2098 = vmax.f32 %v2002, 0.0
  %v2099 = vmax.f32 %v2003, 0.0
  %v2100 = vmax.f32 %v2004, 0.0
  %v2101 = vmax.f32 %v2005, 0.0
  %v2102 = vmax.f32 %v2006, 0.0
  %v2103 = vmin.f32 %v2007, 1.0
  %v2104 = vmin.f32 %v2008, 1.0
  %v2105 = vmin.f32 %v2009, 1.0
  %v2106 = vmin.f32 %v2010, 1.0
  %v2107 = vmin.f32 %v2011, 1.0
  %v2108 = vmin.f32 %v2012, 1.0
  %v2109 = vmin.f32 %v2013, 1.0
  %v2110 = vmin.f32 %v2014, 1.0
  %v2111 = vmin.f32 %v2015, 1.0
  %v2112 = vmin.f32 %v2016, 1.0
  %v2113 = vmin.f32 %v2017, 1.0
  %v2114 = vmin.f32 %v2018, 1.0
  %v2115 = vmin.f32 %v2019, 1.0
  %v2116 = vmin.f32 %v2020, 1.0
  %v2117 = vmin.f32 %v2021, 1.0
  %v2118 = vmin.f32 %v2022, 1.0
  %v2119 = vmin.f32 %v2023, 1.0
  %v2120 = vmin.f32 %v2024, 1.0
  %v2121 = vmin.f32 %v2025, 1.0
  %v2122 = vmin.f32 %v2026, 1.0
  %v2123 = vmin.f32 %v2027, 1.0
  %v2124 = vmin.f32 %v2028, 1.0
  %v2125 = vmin.f32 %v2029, 1.0
  %v2126 = vmin.f32 %v2030, 1.0
  %v2127 = vmin.f32 %v2031, 1.0
  %v2128 = vmin.f32 %v2032, 1.0
  %v2129 = vmin.f32 %v2033, 1.0
  %v2130 = vmin.f32 %v2034, 1.0
  %v2131 = vmin.f32 %v2035, 1.0
  %v2132 = vmin.f32 %v2036, 1.0
  %v2133 = vmin.f32 %v2037, 1.0
  %v2134 = vmin.f32 %v2038, 1.0
  %v2135 = vmin.f32 %v2039, 1.0
  %v2136 = vmin.f32 %v2040, 1.0
  %v2137 = vmin.f32 %v2041, 1.0
  %v2138 = vmin.f32 %v2042, 1.0
  %v2139 = vmin.f32 %v2043, 1.0
  %v2140 = vmin.f32 %v2044, 1.0
  %v2141 = vmin.f32 %v2045, 1.0
  %v2142 = vmin.f32 %v2046, 1.0
  %v2143 = vmin.f32 %v2047, 1.0
  %v2144 = vmin.f32 %v2048, 1.0
  %v2145 = vmin.f32 %v2049, 1.0
  %v2146 = vmin.f32 %v2050, 1.0
  %v2147 = vmin.f32 %v2051, 1.0
  %v2148 = vmin.f32 %v2052, 1.0
  %v2149 = vmin.f32 %v2053, 1.0
  %v2150 = vmin.f32 %v2054, 1.0
  %v2151 = vmin.f32 %v2055, 1.0
  %v2152 = vmin.f32 %v2056, 1.0
  %v2153 = vmin.f32 %v2057, 1.0
  %v2154 = vmin.f32 %v2058, 1.0
  %v2155 = vmin.f32 %v2059, 1.0
  %v2156 = vmin.f32 %v2060, 1.0
  %v2157 = vmin.f32 %v2061, 1.0
  %v2158 = vmin.f32 %v2062, 1.0
  %v2159 = vmin.f32 %v2063, 1.0
  %v2160 = vmin.f32 %v2064, 1.0
  %v2161 = vmin.f32 %v2065, 1.0
  %v2162 = vmin.f32 %v2066, 1.0
  %v2163 = vmin.f32 %v2067, 1.0
  %v2164 = vmin.f32 %v2068, 1.0
  %v2165 = vmin.f32 %v2069, 1.0
  %v2166 = vmin.f32 %v2070, 1.0
  %v2167 = vmin.f32 %v2071, 1.0
  %v2168 = vmin.f32 %v2072, 1.0
  %v2169 = vmin.f32 %v2073, 1.0
  %v2170 = vmin.f32 %v2074, 1.0
  %v2171 = vmin.f32 %v2075, 1.0
  %v2172 = vmin.f32 %v2076, 1.0
  %v2173 = vmin.f32 %v2077, 1.0
  %v2174 = vmin.f32 %v2078, 1.0
  %v2175 = vmin.f32 %v2079, 1.0
  %v2176 = vmin.f32 %v2080, 1.0
  %v2177 = vmin.f32 %v2081, 1.0
  %v2178 = vmin.f32 %v2082, 1.0
  %v2179 = vmin.f32 %v2083, 1.0
  %v2180 = vmin.f32 %v2084, 1.0
  %v2181 = vmin.f32 %v2085, 1.0
  %v2182 = vmin.f32 %v2086, 1.0
  %v2183 = vmin.f32 %v2087, 1.0
  %v2184 = vmin.f32 %v2088, 1.0
  %v2185 = vmin.f32 %v2089, 1.0
  %v2186 = vmin.f32 %v2090, 1.0
  %v2187 = vmin.f32 %v2091, 1.0
  %v2188 = vmin.f32 %v2092, 1.0
  %v2189 = vmin.f32 %v2093, 1.0
  %v2190 = vmin.f32 %v2094, 1.0
  %v2191 = vmin.f32 %v2095, 1.0
  %v2192 = vmin.f32 %v2096, 1.0
  %v2193 = vmin.f32 %v2097, 1.0
  %v2194 = vmin.f32 %v2098, 1.0
  %v2195 = vmin.f32 %v2099, 1.0
  %v2196 = vmin.f32 %v2100, 1.0
  %v2197 = vmin.f32 %v2101, 1.0
  %v2198 = vmin.f32 %v2102, 1.0
  %v2199 = vmul.f32 %v2103, %v2104
  %v2200 = vmul.f32 %v2106, %v2107
  %v2201 = vmul.f32 %v2109, %v2110
  %v2202 = vmul.f32 %v2112, %v2113
  %v2203 = vmul.f32 %v2115, %v2116
  %v2204 = vmul.f32 %v2118, %v2119
  %v2205 = vmul.f32 %v2121, %v2122
  %v2206 = vmul.f32 %v2124, %v2125
  %v2207 = vmul.f32 %v2127, %v2128
  %v2208 = vmul.f32 %v2130, %v2131
  %v2209 = vmul.f32 %v2133, %v2134
  %v2210 = vmul.f32 %v2136, %v2137
  %v2211 = vmul.f32 %v2139, %v2140
  %v2212 = vmul.f32 %v2142, %v2143
  %v2213 = vmul.f32 %v2145, %v2146
  %v2214 = vmul.f32 %v2148, %v2149
  %v2215 = vmul.f32 %v2151, %v2152
  %v2216 = vmul.f32 %v2154, %v2155
  %v2217 = vmul.f32 %v2157, %v2158
  %v2218 = vmul.f32 %v2160, %v2161
  %v2219 = vmul.f32 %v2163, %v2164
  %v2220 = vmul.f32 %v2166, %v2167
  %v2221 = vmul.f32 %v2169, %v2170
  %v2222 = vmul.f32 %v2172, %v2173
  %v2223 = vmul.f32 %v2175, %v2176
  %v2224 = vmul.f32 %v2178, %v2179
  %v2225 = vmul.f32 %v2181, %v2182
  %v2226 = vmul.f32 %v2184, %v2185
  %v2227 = vmul.f32 %v2187, %v2188
  %v2228 = vmul.f32 %v2190, %v2191
  %v2229 = vmul.f32 %v2193, %v2194
  %v2230 = vmul.f32 %v2196, %v2197
  %v2231 = vmul.f32 %v2199, %v2105
  %v2232 = vmul.f32 %v2200, %v2108
  %v2233 = vmul.f32 %v2201, %v2111
  %v2234 = vmul.f32 %v2202, %v2114
  %v2235 = vmul.f32 %v2203, %v2117
  %v2236 = vmul.f32 %v2204, %v2120
  %v2237 = vmul.f32 %v2205, %v2123
  %v2238 = vmul.f32 %v2206, %v2126
  %v2239 = vmul.f32 %v2207, %v2129
  %v2240 = vmul.f32 %v2208, %v2132
  %v2241 = vmul.f32 %v2209, %v2135
  %v2242 = vmul.f32 %v2210, %v2138
  %v2243 = vmul.f32 %v2211, %v2141
  %v2244 = vmul.f32 %v2212, %v2144
  %v2245 = vmul.f32 %v2213, %v2147
  %v2246 = vmul.f32 %v2214, %v2150
  %v2247 = vmul.f32 %v2215, %v2153
  %v2248 = vmul.f32 %v2216, %v2156
  %v2249 = vmul.f32 %v2217, %v2159
  %v2250 = vmul.f32 %v2218, %v2162
  %v2251 = vmul.f32 %v2219, %v2165
  %v2252 = vmul.f32 %v2220, %v2168
  %v2253 = vmul.f32 %v2221, %v2171
  %v2254 = vmul.f32 %v2222, %v2174
  %v2255 = vmul.f32 %v2223, %v2177
  %v2256 = vmul.f32 %v2224, %v2180
  %v2257 = vmul.f32 %v2225, %v2183
  %v2258 = vmul.f32 %v2226, %v2186
  %v2259 = vmul.f32 %v2227, %v2189
  %v2260 = vmul.f32 %v2228, %v2192
  %v2261 = vmul.f32 %v2229, %v2195
  %v2262 = vmul.f32 %v2230, %v2198
  %v2263 = vpack.c.bf16 %v2232, %v2231
  %v2264 = vpack.c.bf16 %v2234, %v2233
  %v2265 = vpack.c.bf16 %v2236, %v2235
  %v2266 = vpack.c.bf16 %v2238, %v2237
  %v2267 = vpack.c.bf16 %v2240, %v2239
  %v2268 = vpack.c.bf16 %v2242, %v2241
  %v2269 = vpack.c.bf16 %v2244, %v2243
  %v2270 = vpack.c.bf16 %v2246, %v2245
  %v2271 = vpack.c.bf16 %v2248, %v2247
  %v2272 = vpack.c.bf16 %v2250, %v2249
  %v2273 = vpack.c.bf16 %v2252, %v2251
  %v2274 = vpack.c.bf16 %v2254, %v2253
  %v2275 = vpack.c.bf16 %v2256, %v2255
  %v2276 = vpack.c.bf16 %v2258, %v2257
  %v2277 = vpack.c.bf16 %v2260, %v2259
  %v2278 = vpack.c.bf16 %v2262, %v2261
  %v2279 = vld [vmem:[%s8] sm:$0xf]
  %v2280 = vld [vmem:[%s8 + $0x4] sm:$0xf]
  %v2281 = vld [vmem:[%s8 + $0x8] sm:$0xf]
  %v2282 = vld [vmem:[%s8 + $0xc] sm:$0xf]
  %v2283 = vld [vmem:[%s8 + $0x10] sm:$0xf]
  %v2284 = vld [vmem:[%s8 + $0x14] sm:$0xf]
  %v2285 = vld [vmem:[%s8 + $0x18] sm:$0xf]
  %v2286 = vld [vmem:[%s8 + $0x1c] sm:$0xf]
  %v2287 = vld [vmem:[%s8 + $0x20] sm:$0xf]
  %v2288 = vld [vmem:[%s8 + $0x24] sm:$0xf]
  %v2289 = vld [vmem:[%s8 + $0x28] sm:$0xf]
  %v2290 = vld [vmem:[%s8 + $0x2c] sm:$0xf]
  %v2291 = vld [vmem:[%s8 + $0x30] sm:$0xf]
  %v2292 = vld [vmem:[%s8 + $0x34] sm:$0xf]
  %v2293 = vld [vmem:[%s8 + $0x38] sm:$0xf]
  %v2294 = vld [vmem:[%s8 + $0x3c] sm:$0xf]
  %v2311 = vunpack.c.l.b16 %v2279
  %v2312 = vunpack.c.l.b16 %v2280
  %v2313 = vunpack.c.l.b16 %v2281
  %v2314 = vunpack.c.l.b16 %v2282
  %v2315 = vunpack.c.l.b16 %v2283
  %v2316 = vunpack.c.l.b16 %v2284
  %v2317 = vunpack.c.l.b16 %v2285
  %v2318 = vunpack.c.l.b16 %v2286
  %v2319 = vunpack.c.l.b16 %v2287
  %v2320 = vunpack.c.l.b16 %v2288
  %v2321 = vunpack.c.l.b16 %v2289
  %v2322 = vunpack.c.l.b16 %v2290
  %v2323 = vunpack.c.l.b16 %v2291
  %v2324 = vunpack.c.l.b16 %v2292
  %v2325 = vunpack.c.l.b16 %v2293
  %v2326 = vunpack.c.l.b16 %v2294
  %v2327 = vpack.c.b16 %v2312, %v2311
  %v2328 = vpack.c.b16 %v2314, %v2313
  %v2329 = vpack.c.b16 %v2316, %v2315
  %v2330 = vpack.c.b16 %v2318, %v2317
  %v2331 = vpack.c.b16 %v2320, %v2319
  %v2332 = vpack.c.b16 %v2322, %v2321
  %v2333 = vpack.c.b16 %v2324, %v2323
  %v2334 = vpack.c.b16 %v2326, %v2325
  %2343 = vmatprep.subr.bf16.mxu0 0
  %2344 = vmatpush1.bf16.msra.mxu0 %v2327
  %2345 = vmatprep.subr.bf16.mxu0 0
  %2346 = vmatpush1.bf16.msra.mxu0 %v2328
  %2347 = vmatprep.subr.bf16.mxu0 0
  %2348 = vmatpush1.bf16.msra.mxu0 %v2329
  %2349 = vmatprep.subr.bf16.mxu0 0
  %2350 = vmatpush1.bf16.msra.mxu0 %v2330
  %2351 = vmatprep.subr.bf16.mxu0 0
  %2352 = vmatpush1.bf16.msra.mxu0 %v2331
  %2353 = vmatprep.subr.bf16.mxu0 0
  %2354 = vmatpush1.bf16.msra.mxu0 %v2332
  %2355 = vmatprep.subr.bf16.mxu0 0
  %2356 = vmatpush1.bf16.msra.mxu0 %v2333
  %2357 = vmatprep.subr.bf16.mxu0 0
  %2358 = vmatpush1.bf16.msra.mxu0 %v2334
  %2359 = vmatprep.subr.bf16.mxu0 0
  %2360 = vmatpush1.bf16.msra.mxu0 0
  %2361 = vmatprep.subr.bf16.mxu0 0
  %2362 = vmatpush1.bf16.msra.mxu0 0
  %2363 = vmatprep.subr.bf16.mxu0 0
  %2364 = vmatpush1.bf16.msra.mxu0 0
  %2365 = vmatprep.subr.bf16.mxu0 0
  %2366 = vmatpush1.bf16.msra.mxu0 0
  %2367 = vmatprep.subr.bf16.mxu0 0
  %2368 = vmatpush1.bf16.msra.mxu0 0
  %2369 = vmatprep.subr.bf16.mxu0 0
  %2370 = vmatpush1.bf16.msra.mxu0 0
  %2371 = vmatprep.subr.bf16.mxu0 0
  %2372 = vmatpush1.bf16.msra.mxu0 0
  %2373 = vmatprep.subr.bf16.mxu0 0
  %2374 = vmatpush1.bf16.msra.mxu0 0
  %2375 = vmatprep.mubr.bf16.mxu0 0
  %2376 = vmatmul.mubr.bf16.gmra.mrb[0].mxu0 %v2263
  %v2377 = vpop.f32.mrb[0].mxu0
  %v2378 = vadd.f32 0.0, %v2377
  %v2379 = vpop.f32.mrb[0].mxu0
  %v2380 = vpop.f32.mrb[0].mxu0
  %v2381 = vadd.f32 0.0, %v2380
  %v2382 = vpop.f32.mrb[0].mxu0
  %2383 = vmatprep.mubr.bf16.mxu0 0
  %2384 = vmatmul.mubr.bf16.gmra.mrb[0].mxu0 %v2264
  %v2385 = vpop.f32.mrb[0].mxu0
  %v2386 = vadd.f32 0.0, %v2385
  %v2387 = vpop.f32.mrb[0].mxu0
  %v2388 = vpop.f32.mrb[0].mxu0
  %v2389 = vadd.f32 0.0, %v2388
  %v2390 = vpop.f32.mrb[0].mxu0
  %2391 = vmatprep.mubr.bf16.mxu0 0
  %2392 = vmatmul.mubr.bf16.gmra.mrb[0].mxu0 %v2265
  %v2393 = vpop.f32.mrb[0].mxu0
  %v2394 = vadd.f32 0.0, %v2393
  %v2395 = vpop.f32.mrb[0].mxu0
  %v2396 = vpop.f32.mrb[0].mxu0
  %v2397 = vadd.f32 0.0, %v2396
  %v2398 = vpop.f32.mrb[0].mxu0
  %2399 = vmatprep.mubr.bf16.mxu0 0
  %2400 = vmatmul.mubr.bf16.gmra.mrb[0].mxu0 %v2266
  %v2401 = vpop.f32.mrb[0].mxu0
  %v2402 = vadd.f32 0.0, %v2401
  %v2403 = vpop.f32.mrb[0].mxu0
  %v2404 = vpop.f32.mrb[0].mxu0
  %v2405 = vadd.f32 0.0, %v2404
  %v2406 = vpop.f32.mrb[0].mxu0
  %2407 = vmatprep.mubr.bf16.mxu0 0
  %2408 = vmatmul.mubr.bf16.gmra.mrb[0].mxu0 %v2267
  %v2409 = vpop.f32.mrb[0].mxu0
  %v2410 = vadd.f32 0.0, %v2409
  %v2411 = vpop.f32.mrb[0].mxu0
  %v2412 = vpop.f32.mrb[0].mxu0
  %v2413 = vadd.f32 0.0, %v2412
  %v2414 = vpop.f32.mrb[0].mxu0
  %2415 = vmatprep.mubr.bf16.mxu0 0
  %2416 = vmatmul.mubr.bf16.gmra.mrb[0].mxu0 %v2268
  %v2417 = vpop.f32.mrb[0].mxu0
  %v2418 = vadd.f32 0.0, %v2417
  %v2419 = vpop.f32.mrb[0].mxu0
  %v2420 = vpop.f32.mrb[0].mxu0
  %v2421 = vadd.f32 0.0, %v2420
  %v2422 = vpop.f32.mrb[0].mxu0
  %2423 = vmatprep.mubr.bf16.mxu0 0
  %2424 = vmatmul.mubr.bf16.gmra.mrb[0].mxu0 %v2269
  %v2425 = vpop.f32.mrb[0].mxu0
  %v2426 = vadd.f32 0.0, %v2425
  %v2427 = vpop.f32.mrb[0].mxu0
  %v2428 = vpop.f32.mrb[0].mxu0
  %v2429 = vadd.f32 0.0, %v2428
  %v2430 = vpop.f32.mrb[0].mxu0
  %2431 = vmatprep.mubr.bf16.mxu0 0
  %2432 = vmatmul.mubr.bf16.gmra.mrb[0].mxu0 %v2270
  %v2433 = vpop.f32.mrb[0].mxu0
  %v2434 = vadd.f32 0.0, %v2433
  %v2435 = vpop.f32.mrb[0].mxu0
  %v2436 = vpop.f32.mrb[0].mxu0
  %v2437 = vadd.f32 0.0, %v2436
  %v2438 = vpop.f32.mrb[0].mxu0
  %2439 = vmatprep.mubr.bf16.mxu0 0
  %2440 = vmatmul.mubr.bf16.gmra.mrb[0].mxu0 %v2271
  %v2441 = vpop.f32.mrb[0].mxu0
  %v2442 = vadd.f32 0.0, %v2441
  %v2443 = vpop.f32.mrb[0].mxu0
  %v2444 = vpop.f32.mrb[0].mxu0
  %v2445 = vadd.f32 0.0, %v2444
  %v2446 = vpop.f32.mrb[0].mxu0
  %2447 = vmatprep.mubr.bf16.mxu0 0
  %2448 = vmatmul.mubr.bf16.gmra.mrb[0].mxu0 %v2272
  %v2449 = vpop.f32.mrb[0].mxu0
  %v2450 = vadd.f32 0.0, %v2449
  %v2451 = vpop.f32.mrb[0].mxu0
  %v2452 = vpop.f32.mrb[0].mxu0
  %v2453 = vadd.f32 0.0, %v2452
  %v2454 = vpop.f32.mrb[0].mxu0
  %2455 = vmatprep.mubr.bf16.mxu0 0
  %2456 = vmatmul.mubr.bf16.gmra.mrb[0].mxu0 %v2273
  %v2457 = vpop.f32.mrb[0].mxu0
  %v2458 = vadd.f32 0.0, %v2457
  %v2459 = vpop.f32.mrb[0].mxu0
  %v2460 = vpop.f32.mrb[0].mxu0
  %v2461 = vadd.f32 0.0, %v2460
  %v2462 = vpop.f32.mrb[0].mxu0
  %2463 = vmatprep.mubr.bf16.mxu0 0
  %2464 = vmatmul.mubr.bf16.gmra.mrb[0].mxu0 %v2274
  %v2465 = vpop.f32.mrb[0].mxu0
  %v2466 = vadd.f32 0.0, %v2465
  %v2467 = vpop.f32.mrb[0].mxu0
  %v2468 = vpop.f32.mrb[0].mxu0
  %v2469 = vadd.f32 0.0, %v2468
  %v2470 = vpop.f32.mrb[0].mxu0
  %2471 = vmatprep.mubr.bf16.mxu0 0
  %2472 = vmatmul.mubr.bf16.gmra.mrb[0].mxu0 %v2275
  %v2473 = vpop.f32.mrb[0].mxu0
  %v2474 = vadd.f32 0.0, %v2473
  %v2475 = vpop.f32.mrb[0].mxu0
  %v2476 = vpop.f32.mrb[0].mxu0
  %v2477 = vadd.f32 0.0, %v2476
  %v2478 = vpop.f32.mrb[0].mxu0
  %2479 = vmatprep.mubr.bf16.mxu0 0
  %2480 = vmatmul.mubr.bf16.gmra.mrb[0].mxu0 %v2276
  %v2481 = vpop.f32.mrb[0].mxu0
  %v2482 = vadd.f32 0.0, %v2481
  %v2483 = vpop.f32.mrb[0].mxu0
  %v2484 = vpop.f32.mrb[0].mxu0
  %v2485 = vadd.f32 0.0, %v2484
  %v2486 = vpop.f32.mrb[0].mxu0
  %2487 = vmatprep.mubr.bf16.mxu0 0
  %2488 = vmatmul.mubr.bf16.gmra.mrb[0].mxu0 %v2277
  %v2489 = vpop.f32.mrb[0].mxu0
  %v2490 = vadd.f32 0.0, %v2489
  %v2491 = vpop.f32.mrb[0].mxu0
  %v2492 = vpop.f32.mrb[0].mxu0
  %v2493 = vadd.f32 0.0, %v2492
  %v2494 = vpop.f32.mrb[0].mxu0
  %2495 = vmatprep.mubr.bf16.mxu0 0
  %2496 = vmatmul.mubr.bf16.gmra.mrb[0].mxu0 %v2278
  %v2497 = vpop.f32.mrb[0].mxu0
  %v2498 = vadd.f32 0.0, %v2497
  %v2499 = vpop.f32.mrb[0].mxu0
  %v2500 = vpop.f32.mrb[0].mxu0
  %v2501 = vadd.f32 0.0, %v2500
  %v2502 = vpop.f32.mrb[0].mxu0
  %2503 = vdwg.mxu0
  %v2504 = vadd.f32 %v956, %v2378
  %v2505 = vadd.f32 %v959, %v2381
  %v2506 = vadd.f32 %v964, %v2386
  %v2507 = vadd.f32 %v967, %v2389
  %v2508 = vadd.f32 %v972, %v2394
  %v2509 = vadd.f32 %v975, %v2397
  %v2510 = vadd.f32 %v980, %v2402
  %v2511 = vadd.f32 %v983, %v2405
  %v2512 = vadd.f32 %v988, %v2410
  %v2513 = vadd.f32 %v991, %v2413
  %v2514 = vadd.f32 %v996, %v2418
  %v2515 = vadd.f32 %v999, %v2421
  %v2516 = vadd.f32 %v1004, %v2426
  %v2517 = vadd.f32 %v1007, %v2429
  %v2518 = vadd.f32 %v1012, %v2434
  %v2519 = vadd.f32 %v1015, %v2437
  %v2520 = vadd.f32 %v1020, %v2442
  %v2521 = vadd.f32 %v1023, %v2445
  %v2522 = vadd.f32 %v1028, %v2450
  %v2523 = vadd.f32 %v1031, %v2453
  %v2524 = vadd.f32 %v1036, %v2458
  %v2525 = vadd.f32 %v1039, %v2461
  %v2526 = vadd.f32 %v1044, %v2466
  %v2527 = vadd.f32 %v1047, %v2469
  %v2528 = vadd.f32 %v1052, %v2474
  %v2529 = vadd.f32 %v1055, %v2477
  %v2530 = vadd.f32 %v1060, %v2482
  %v2531 = vadd.f32 %v1063, %v2485
  %v2532 = vadd.f32 %v1068, %v2490
  %v2533 = vadd.f32 %v1071, %v2493
  %v2534 = vadd.f32 %v1076, %v2498
  %v2535 = vadd.f32 %v1079, %v2501
  %v2536 = vpack.c.bf16 %v2505, %v2504
  %v2537 = vpack.c.bf16 %v2507, %v2506
  %v2538 = vpack.c.bf16 %v2509, %v2508
  %v2539 = vpack.c.bf16 %v2511, %v2510
  %v2540 = vpack.c.bf16 %v2513, %v2512
  %v2541 = vpack.c.bf16 %v2515, %v2514
  %v2542 = vpack.c.bf16 %v2517, %v2516
  %v2543 = vpack.c.bf16 %v2519, %v2518
  %v2544 = vpack.c.bf16 %v2521, %v2520
  %v2545 = vpack.c.bf16 %v2523, %v2522
  %v2546 = vpack.c.bf16 %v2525, %v2524
  %v2547 = vpack.c.bf16 %v2527, %v2526
  %v2548 = vpack.c.bf16 %v2529, %v2528
  %v2549 = vpack.c.bf16 %v2531, %v2530
  %v2550 = vpack.c.bf16 %v2533, %v2532
  %v2551 = vpack.c.bf16 %v2535, %v2534
  %v2552 = vld [vmem:[%s1] sm:$0xf]
  %v2553 = vld [vmem:[%s1 + $0x4] sm:$0xf]
  %v2556 = vunpack.c.l.b16 %v2552
  %v2557 = vunpack.c.l.b16 %v2553
  %v2558 = vpack.c.b16 %v2557, %v2556
  %v2561 = vsel %vm182, %v2536, 0
  %v2564 = vsel %vm182, %v2537, 0
  %v2567 = vsel %vm182, %v2538, 0
  %v2570 = vsel %vm182, %v2539, 0
  %v2573 = vsel %vm182, %v2540, 0
  %v2576 = vsel %vm182, %v2541, 0
  %v2579 = vsel %vm182, %v2542, 0
  %v2582 = vsel %vm182, %v2543, 0
  %v2585 = vsel %vm182, %v2544, 0
  %v2588 = vsel %vm182, %v2545, 0
  %v2591 = vsel %vm182, %v2546, 0
  %v2594 = vsel %vm182, %v2547, 0
  %v2597 = vsel %vm182, %v2548, 0
  %v2600 = vsel %vm182, %v2549, 0
  %v2603 = vsel %vm182, %v2550, 0
  %v2606 = vsel %vm182, %v2551, 0
  %2608 = vmatprep.subr.bf16.mxu0 0
  %2609 = vmatpush1.bf16.msra.mxu0 %v2558
  %2610 = vmatprep.subr.bf16.mxu0 0
  %2611 = vmatpush1.bf16.msra.mxu0 0
  %2612 = vmatprep.subr.bf16.mxu0 0
  %2613 = vmatpush1.bf16.msra.mxu0 0
  %2614 = vmatprep.subr.bf16.mxu0 0
  %2615 = vmatpush1.bf16.msra.mxu0 0
  %2616 = vmatprep.subr.bf16.mxu0 0
  %2617 = vmatpush1.bf16.msra.mxu0 0
  %2618 = vmatprep.subr.bf16.mxu0 0
  %2619 = vmatpush1.bf16.msra.mxu0 0
  %2620 = vmatprep.subr.bf16.mxu0 0
  %2621 = vmatpush1.bf16.msra.mxu0 0
  %2622 = vmatprep.subr.bf16.mxu0 0
  %2623 = vmatpush1.bf16.msra.mxu0 0
  %2624 = vmatprep.subr.bf16.mxu0 0
  %2625 = vmatpush1.bf16.msra.mxu0 0
  %2626 = vmatprep.subr.bf16.mxu0 0
  %2627 = vmatpush1.bf16.msra.mxu0 0
  %2628 = vmatprep.subr.bf16.mxu0 0
  %2629 = vmatpush1.bf16.msra.mxu0 0
  %2630 = vmatprep.subr.bf16.mxu0 0
  %2631 = vmatpush1.bf16.msra.mxu0 0
  %2632 = vmatprep.subr.bf16.mxu0 0
  %2633 = vmatpush1.bf16.msra.mxu0 0
  %2634 = vmatprep.subr.bf16.mxu0 0
  %2635 = vmatpush1.bf16.msra.mxu0 0
  %2636 = vmatprep.subr.bf16.mxu0 0
  %2637 = vmatpush1.bf16.msra.mxu0 0
  %2638 = vmatprep.subr.bf16.mxu0 0
  %2639 = vmatpush1.bf16.msra.mxu0 0
  %2640 = vmatprep.mubr.bf16.mxu0 0
  %2641 = vmatmul.mubr.bf16.gmra.mrb[0].mxu0 %v2561
  %v2642 = vpop.f32.mrb[0].mxu0
  %v2643 = vadd.f32 0.0, %v2642
  %v2644 = vpop.f32.mrb[0].mxu0
  %v2645 = vpop.f32.mrb[0].mxu0
  %v2646 = vadd.f32 0.0, %v2645
  %v2647 = vpop.f32.mrb[0].mxu0
  %2648 = vmatprep.mubr.bf16.mxu0 0
  %2649 = vmatmul.mubr.bf16.gmra.mrb[0].mxu0 %v2564
  %v2650 = vpop.f32.mrb[0].mxu0
  %v2651 = vadd.f32 0.0, %v2650
  %v2652 = vpop.f32.mrb[0].mxu0
  %v2653 = vpop.f32.mrb[0].mxu0
  %v2654 = vadd.f32 0.0, %v2653
  %v2655 = vpop.f32.mrb[0].mxu0
  %2656 = vmatprep.mubr.bf16.mxu0 0
  %2657 = vmatmul.mubr.bf16.gmra.mrb[0].mxu0 %v2567
  %v2658 = vpop.f32.mrb[0].mxu0
  %v2659 = vadd.f32 0.0, %v2658
  %v2660 = vpop.f32.mrb[0].mxu0
  %v2661 = vpop.f32.mrb[0].mxu0
  %v2662 = vadd.f32 0.0, %v2661
  %v2663 = vpop.f32.mrb[0].mxu0
  %2664 = vmatprep.mubr.bf16.mxu0 0
  %2665 = vmatmul.mubr.bf16.gmra.mrb[0].mxu0 %v2570
  %v2666 = vpop.f32.mrb[0].mxu0
  %v2667 = vadd.f32 0.0, %v2666
  %v2668 = vpop.f32.mrb[0].mxu0
  %v2669 = vpop.f32.mrb[0].mxu0
  %v2670 = vadd.f32 0.0, %v2669
  %v2671 = vpop.f32.mrb[0].mxu0
  %2672 = vmatprep.mubr.bf16.mxu0 0
  %2673 = vmatmul.mubr.bf16.gmra.mrb[0].mxu0 %v2573
  %v2674 = vpop.f32.mrb[0].mxu0
  %v2675 = vadd.f32 0.0, %v2674
  %v2676 = vpop.f32.mrb[0].mxu0
  %v2677 = vpop.f32.mrb[0].mxu0
  %v2678 = vadd.f32 0.0, %v2677
  %v2679 = vpop.f32.mrb[0].mxu0
  %2680 = vmatprep.mubr.bf16.mxu0 0
  %2681 = vmatmul.mubr.bf16.gmra.mrb[0].mxu0 %v2576
  %v2682 = vpop.f32.mrb[0].mxu0
  %v2683 = vadd.f32 0.0, %v2682
  %v2684 = vpop.f32.mrb[0].mxu0
  %v2685 = vpop.f32.mrb[0].mxu0
  %v2686 = vadd.f32 0.0, %v2685
  %v2687 = vpop.f32.mrb[0].mxu0
  %2688 = vmatprep.mubr.bf16.mxu0 0
  %2689 = vmatmul.mubr.bf16.gmra.mrb[0].mxu0 %v2579
  %v2690 = vpop.f32.mrb[0].mxu0
  %v2691 = vadd.f32 0.0, %v2690
  %v2692 = vpop.f32.mrb[0].mxu0
  %v2693 = vpop.f32.mrb[0].mxu0
  %v2694 = vadd.f32 0.0, %v2693
  %v2695 = vpop.f32.mrb[0].mxu0
  %2696 = vmatprep.mubr.bf16.mxu0 0
  %2697 = vmatmul.mubr.bf16.gmra.mrb[0].mxu0 %v2582
  %v2698 = vpop.f32.mrb[0].mxu0
  %v2699 = vadd.f32 0.0, %v2698
  %v2700 = vpop.f32.mrb[0].mxu0
  %v2701 = vpop.f32.mrb[0].mxu0
  %v2702 = vadd.f32 0.0, %v2701
  %v2703 = vpop.f32.mrb[0].mxu0
  %2704 = vmatprep.mubr.bf16.mxu0 0
  %2705 = vmatmul.mubr.bf16.gmra.mrb[0].mxu0 %v2585
  %v2706 = vpop.f32.mrb[0].mxu0
  %v2707 = vadd.f32 0.0, %v2706
  %v2708 = vpop.f32.mrb[0].mxu0
  %v2709 = vpop.f32.mrb[0].mxu0
  %v2710 = vadd.f32 0.0, %v2709
  %v2711 = vpop.f32.mrb[0].mxu0
  %2712 = vmatprep.mubr.bf16.mxu0 0
  %2713 = vmatmul.mubr.bf16.gmra.mrb[0].mxu0 %v2588
  %v2714 = vpop.f32.mrb[0].mxu0
  %v2715 = vadd.f32 0.0, %v2714
  %v2716 = vpop.f32.mrb[0].mxu0
  %v2717 = vpop.f32.mrb[0].mxu0
  %v2718 = vadd.f32 0.0, %v2717
  %v2719 = vpop.f32.mrb[0].mxu0
  %2720 = vmatprep.mubr.bf16.mxu0 0
  %2721 = vmatmul.mubr.bf16.gmra.mrb[0].mxu0 %v2591
  %v2722 = vpop.f32.mrb[0].mxu0
  %v2723 = vadd.f32 0.0, %v2722
  %v2724 = vpop.f32.mrb[0].mxu0
  %v2725 = vpop.f32.mrb[0].mxu0
  %v2726 = vadd.f32 0.0, %v2725
  %v2727 = vpop.f32.mrb[0].mxu0
  %2728 = vmatprep.mubr.bf16.mxu0 0
  %2729 = vmatmul.mubr.bf16.gmra.mrb[0].mxu0 %v2594
  %v2730 = vpop.f32.mrb[0].mxu0
  %v2731 = vadd.f32 0.0, %v2730
  %v2732 = vpop.f32.mrb[0].mxu0
  %v2733 = vpop.f32.mrb[0].mxu0
  %v2734 = vadd.f32 0.0, %v2733
  %v2735 = vpop.f32.mrb[0].mxu0
  %2736 = vmatprep.mubr.bf16.mxu0 0
  %2737 = vmatmul.mubr.bf16.gmra.mrb[0].mxu0 %v2597
  %v2738 = vpop.f32.mrb[0].mxu0
  %v2739 = vadd.f32 0.0, %v2738
  %v2740 = vpop.f32.mrb[0].mxu0
  %v2741 = vpop.f32.mrb[0].mxu0
  %v2742 = vadd.f32 0.0, %v2741
  %v2743 = vpop.f32.mrb[0].mxu0
  %2744 = vmatprep.mubr.bf16.mxu0 0
  %2745 = vmatmul.mubr.bf16.gmra.mrb[0].mxu0 %v2600
  %v2746 = vpop.f32.mrb[0].mxu0
  %v2747 = vadd.f32 0.0, %v2746
  %v2748 = vpop.f32.mrb[0].mxu0
  %v2749 = vpop.f32.mrb[0].mxu0
  %v2750 = vadd.f32 0.0, %v2749
  %v2751 = vpop.f32.mrb[0].mxu0
  %2752 = vmatprep.mubr.bf16.mxu0 0
  %2753 = vmatmul.mubr.bf16.gmra.mrb[0].mxu0 %v2603
  %v2754 = vpop.f32.mrb[0].mxu0
  %v2755 = vadd.f32 0.0, %v2754
  %v2756 = vpop.f32.mrb[0].mxu0
  %v2757 = vpop.f32.mrb[0].mxu0
  %v2758 = vadd.f32 0.0, %v2757
  %v2759 = vpop.f32.mrb[0].mxu0
  %2760 = vmatprep.mubr.bf16.mxu0 0
  %2761 = vmatmul.mubr.bf16.gmra.mrb[0].mxu0 %v2606
  %v2762 = vpop.f32.mrb[0].mxu0
  %v2763 = vadd.f32 0.0, %v2762
  %v2764 = vpop.f32.mrb[0].mxu0
  %v2765 = vpop.f32.mrb[0].mxu0
  %v2766 = vadd.f32 0.0, %v2765
  %v2767 = vpop.f32.mrb[0].mxu0
  %2768 = vdwg.mxu0
  %2769 = vst [vmem:[%s9] sm:$0xff] %v2643
  %2770 = vst [vmem:[%s9 + $0x8] sm:$0xff] %v2646
  %2771 = vst [vmem:[%s9 + $0x10] sm:$0xff] %v2651
  %2772 = vst [vmem:[%s9 + $0x18] sm:$0xff] %v2654
  %2773 = vst [vmem:[%s9 + $0x20] sm:$0xff] %v2659
  %2774 = vst [vmem:[%s9 + $0x28] sm:$0xff] %v2662
  %2775 = vst [vmem:[%s9 + $0x30] sm:$0xff] %v2667
  %2776 = vst [vmem:[%s9 + $0x38] sm:$0xff] %v2670
  %2777 = vst [vmem:[%s9 + $0x40] sm:$0xff] %v2675
  %2778 = vst [vmem:[%s9 + $0x48] sm:$0xff] %v2678
  %2779 = vst [vmem:[%s9 + $0x50] sm:$0xff] %v2683
  %2780 = vst [vmem:[%s9 + $0x58] sm:$0xff] %v2686
  %2781 = vst [vmem:[%s9 + $0x60] sm:$0xff] %v2691
  %2782 = vst [vmem:[%s9 + $0x68] sm:$0xff] %v2694
  %2783 = vst [vmem:[%s9 + $0x70] sm:$0xff] %v2699
  %2784 = vst [vmem:[%s9 + $0x78] sm:$0xff] %v2702
  %2785 = vst [vmem:[%s9 + $0x80] sm:$0xff] %v2707
  %2786 = vst [vmem:[%s9 + $0x88] sm:$0xff] %v2710
  %2787 = vst [vmem:[%s9 + $0x90] sm:$0xff] %v2715
  %2788 = vst [vmem:[%s9 + $0x98] sm:$0xff] %v2718
  %2789 = vst [vmem:[%s9 + $0xa0] sm:$0xff] %v2723
  %2790 = vst [vmem:[%s9 + $0xa8] sm:$0xff] %v2726
  %2791 = vst [vmem:[%s9 + $0xb0] sm:$0xff] %v2731
  %2792 = vst [vmem:[%s9 + $0xb8] sm:$0xff] %v2734
  %2793 = vst [vmem:[%s9 + $0xc0] sm:$0xff] %v2739
  %2794 = vst [vmem:[%s9 + $0xc8] sm:$0xff] %v2742
  %2795 = vst [vmem:[%s9 + $0xd0] sm:$0xff] %v2747
  %2796 = vst [vmem:[%s9 + $0xd8] sm:$0xff] %v2750
  %2797 = vst [vmem:[%s9 + $0xe0] sm:$0xff] %v2755
  %2798 = vst [vmem:[%s9 + $0xe8] sm:$0xff] %v2758
  %2799 = vst [vmem:[%s9 + $0xf0] sm:$0xff] %v2763
  %2800 = vst [vmem:[%s9 + $0xf8] sm:$0xff] %v2766
  // Predicated region
  $region38: #{node_forward.1} parent=0 // pred_check
    _
  $region39: #{node_forward.1} parent=0 // pred_check_branch
    %2802 = sbr.rel (0) target = $region41
  $region40: #{node_forward.1} parent=0 // pred_region
    _
  $region41: #{node_forward.1} parent=0 // pred_fallthru
    _
  // Predicated region
  $region42: #{node_forward.1} parent=0 // pred_check
    _
  $region43: #{node_forward.1} parent=0 // pred_check_branch
    %2804 = sbr.rel (0) target = $region45
  $region44: #{node_forward.1} parent=0 // pred_region
    _
  $region45: #{node_forward.1} parent=0 // pred_fallthru
    _

</llo_original>
